<compile_context>
chip_gen: v5e
topology: v5e:2x2
jax: 0.10.0
libtpu: 0.0.40
codegen_flags: <defaults>
</compile_context>

<pallas_src>
import functools
import math

import jax
import jax.numpy as jnp
from jax.experimental import pallas as pl
from jax.experimental.pallas import tpu as pltpu


# ----------------------------- config ---------------------------------------
B = 2
L = 8
D_MODEL = 32
D_INNER = 64          # expand = 2
D_STATE = 16
DT_RANK = math.ceil(D_MODEL / 16)   # = 2
D_CONV = 4
EPS = 1e-5


def _softplus(x):
    # numerically stable softplus, used identically in kernel and reference
    return jnp.maximum(x, 0.0) + jnp.log1p(jnp.exp(-jnp.abs(x)))


def _silu_ref(x):
    return x * (1.0 / (1.0 + jnp.exp(-x)))


def _silu_tanh(x):
    # exact identity: x * sigmoid(x) == 0.5 * x * (1 + tanh(x/2)); one EUP push
    return 0.5 * x * (1.0 + jnp.tanh(0.5 * x))


# ----------------------------- Pallas kernel --------------------------------
def mamba_block_kernel(
    x_ref,        # (L*B, D_MODEL)   time-major rows: r = t*b + bb
    rmsw_ref,     # (1, D_MODEL)
    win_ref,      # (D_MODEL, 2*D_INNER)
    convw_ref,    # (D_CONV, D_INNER)
    convb_ref,    # (1, D_INNER)
    wxf_ref,      # (D_INNER, D_INNER + 2*D_STATE)   fused [x_proj_dt@dt_proj | B | C]
    bdt_ref,      # (1, D_INNER)
    at_ref,       # (D_STATE, D_INNER)               = (-exp(A_log)).T
    dpar_ref,     # (1, D_INNER)
    wout_ref,     # (D_INNER, D_MODEL)
    out_ref,      # (L*B, D_MODEL)
    da_ref,       # VMEM scratch (L*B, D_STATE, D_INNER): hoisted exp(delta*A)
    *,
    b, l, d_inner, d_state, d_conv, eps,
):
    n_rows = b * l
    x_in = x_ref[...]                                   # (n_rows, d_model)

    # ---- RMSNorm -------------------------------------------------------------
    ms = jnp.mean(x_in * x_in, axis=-1, keepdims=True)
    xn = x_in * jax.lax.rsqrt(ms + eps) * rmsw_ref[...]

    # ---- in_proj + split -----------------------------------------------------
    x_and_res = jnp.dot(xn, win_ref[...], preferred_element_type=jnp.float32)
    xi = x_and_res[:, :d_inner]                         # (n_rows, d_inner)
    res = x_and_res[:, d_inner:]                        # (n_rows, d_inner)

    # ---- causal depthwise conv1d (kernel_size=d_conv, padding=d_conv-1, [:l]) -
    # Time-major rows: tap k looks back s = d_conv-1-k time steps, i.e. s*b rows.
    # A zero-filled downward shift of s*b rows is exactly the causal padding and
    # cannot leak across batch boundaries (the shift is a whole number of time
    # steps, so row r = t*b+bb always reads batch bb at time t-s or the zero pad).
    conv_w = convw_ref[...]                             # (d_conv, d_inner)
    xc = xi * conv_w[d_conv - 1:d_conv, :] + convb_ref[...]    # shift-0 tap + bias
    for k in range(d_conv - 1):
        s = (d_conv - 1 - k) * b                        # row shift for this tap
        if s < n_rows:
            tap = xi[:n_rows - s, :] * conv_w[k:k + 1, :]
            xc = xc + jnp.concatenate(
                [jnp.zeros((s, d_inner), jnp.float32), tap], axis=0)
    xc = _silu_tanh(xc)                                 # conv activation

    # ---- fused x_proj (+ dt_proj) ---------------------------------------------
    x_dbl = jnp.dot(xc, wxf_ref[...], preferred_element_type=jnp.float32)
    delta = _softplus(x_dbl[:, :d_inner] + bdt_ref[...])        # (n_rows, d_inner)
    bmt = x_dbl[:, d_inner:d_inner + d_state].T                 # (d_state, n_rows)
    cmt = x_dbl[:, d_inner + d_state:].T                        # (d_state, n_rows)

    # ---- hoisted discretization: one fused EUP pass, one full store -------------
    # (On v6e/v7x this exp can run in bf16 for ~2x EUP throughput; kept f32 here
    # so the identical script is also accuracy-optimal on v5e.)
    at = at_ref[...]                                            # (d_state, d_inner)
    da_ref[...] = jnp.exp(delta[:, None, :] * at[None, :, :])   # (n_rows, d_state, d_inner)

    du = delta * xc                                             # (n_rows, d_inner)

    # ---- selective scan: b independent chains per time step --------------------
    # Serial dependency chain = l FMAs.  dBu (column/row broadcasts) and the
    # C-contraction (VPU mul + sublane reduce) are off the chain; outputs stay
    # in registers (no scratch round trip).
    hs = [jnp.zeros((d_state, d_inner), dtype=jnp.float32) for _ in range(b)]
    ys = []
    for t in range(l):
        for bb in range(b):
            r = t * b + bb
            dbu = du[r:r + 1, :] * bmt[:, r:r + 1]              # (d_state, d_inner)
            hs[bb] = da_ref[r] * hs[bb] + dbu                   # chain FMA
            ys.append(jnp.sum(hs[bb] * cmt[:, r:r + 1], axis=0, keepdims=True))
    y = jnp.concatenate(ys, axis=0) + xc * dpar_ref[...]        # (n_rows, d_inner)

    # ---- gate, out_proj, residual ----------------------------------------------
    y = y * _silu_tanh(res)
    out_ref[...] = (
        jnp.dot(y, wout_ref[...], preferred_element_type=jnp.float32) + x_in)


@jax.jit
def mamba_block(x, p):
    b, l, d_model = x.shape
    n_rows = b * l

    # Exact parameter fusions (done once at weight-load time in a real model):
    #   * dt_proj folded into x_proj:  softplus((x@Wx_dt)@Wdt + b) == softplus(x@(Wx_dt@Wdt) + b)
    #   * A = -exp(A_log), pre-transposed to (d_state, d_inner)
    w_delta = p["w_x"][:, :DT_RANK] @ p["w_dt"]                      # (d_inner, d_inner)
    w_x_fused = jnp.concatenate([w_delta, p["w_x"][:, DT_RANK:]], axis=1)
    neg_a_t = -jnp.exp(p["A_log"]).T                                 # (d_state, d_inner)

    # Time-major row layout (free XLA transpose outside the kernel).
    x_tm = jnp.transpose(x, (1, 0, 2)).reshape(n_rows, d_model)

    kern = functools.partial(
        mamba_block_kernel,
        b=b, l=l, d_inner=D_INNER, d_state=D_STATE, d_conv=D_CONV, eps=EPS)

    vmem_spec = pl.BlockSpec(memory_space=pltpu.MemorySpace.VMEM)
    out_tm = pl.pallas_call(
        kern,
        out_shape=jax.ShapeDtypeStruct((n_rows, d_model), jnp.float32),
        in_specs=[vmem_spec] * 10,
        out_specs=vmem_spec,
        scratch_shapes=[
            pltpu.VMEM((n_rows, D_STATE, D_INNER), jnp.float32),     # hoisted exp(delta*A)
        ],
    )(x_tm, p["rms_w"], p["w_in"], p["w_conv"], p["b_conv"],
      w_x_fused, p["b_dt"], neg_a_t, p["D"], p["w_out"])

    return jnp.transpose(out_tm.reshape(l, b, d_model), (1, 0, 2))


# ----------------------------- pure-JAX reference ---------------------------
def mamba_block_ref(x, p):
    b, l, d_model = x.shape
    xn = x * jax.lax.rsqrt(jnp.mean(x * x, -1, keepdims=True) + EPS) * p["rms_w"][0]
    x_and_res = xn @ p["w_in"]
    xi, res = x_and_res[..., :D_INNER], x_and_res[..., D_INNER:]

    x_pad = jnp.pad(xi, ((0, 0), (D_CONV - 1, 0), (0, 0)))
    xc = sum(x_pad[:, k:k + l, :] * p["w_conv"][k][None, None, :]
             for k in range(D_CONV)) + p["b_conv"][0]
    xc = _silu_ref(xc)

    A = -jnp.exp(p["A_log"])
    x_dbl = xc @ p["w_x"]
    dlt = x_dbl[..., :DT_RANK]
    Bm = x_dbl[..., DT_RANK:DT_RANK + D_STATE]
    Cm = x_dbl[..., DT_RANK + D_STATE:]
    delta = _softplus(dlt @ p["w_dt"] + p["b_dt"][0])

    deltaA = jnp.exp(delta[..., None] * A[None, None])                 # (b,l,d,n)
    deltaBu = delta[..., None] * xc[..., None] * Bm[:, :, None, :]     # (b,l,d,n)

    def step(h, inp):
        dA, dBu, C = inp
        h = dA * h + dBu
        y = jnp.einsum("bdn,bn->bd", h, C)
        return h, y

    h0 = jnp.zeros((b, D_INNER, D_STATE), jnp.float32)
    _, ys = jax.lax.scan(
        step, h0,
        (deltaA.transpose(1, 0, 2, 3), deltaBu.transpose(1, 0, 2, 3),
         Cm.transpose(1, 0, 2)))
    y = ys.transpose(1, 0, 2)                                          # (b,l,d_inner)
    y = y + xc * p["D"][0]
    y = y * _silu_ref(res)
    return y @ p["w_out"] + x


# ----------------------------- params & main ---------------------------------
def make_params(key):
    ks = jax.random.split(key, 8)
    s_in = 1.0 / math.sqrt(D_MODEL)
    s_x = 1.0 / math.sqrt(D_INNER)
    s_dt = 1.0 / math.sqrt(DT_RANK)
    A = jnp.tile(jnp.arange(1, D_STATE + 1, dtype=jnp.float32)[None, :],
                 (D_INNER, 1))
    return {
        "rms_w": jnp.ones((1, D_MODEL), jnp.float32),
        "w_in": jax.random.normal(ks[0], (D_MODEL, 2 * D_INNER), jnp.float32) * s_in,
        "w_conv": jax.random.normal(ks[1], (D_CONV, D_INNER), jnp.float32) * 0.3,
        "b_conv": jax.random.normal(ks[2], (1, D_INNER), jnp.float32) * 0.1,
        "w_x": jax.random.normal(ks[3], (D_INNER, DT_RANK + 2 * D_STATE), jnp.float32) * s_x,
        "w_dt": jax.random.normal(ks[4], (DT_RANK, D_INNER), jnp.float32) * s_dt,
        "b_dt": jax.random.normal(ks[5], (1, D_INNER), jnp.float32) * 0.1,
        "A_log": jnp.log(A),
        "D": jnp.ones((1, D_INNER), jnp.float32),
        "w_out": jax.random.normal(ks[6], (D_INNER, D_MODEL), jnp.float32) * s_x,
    }


if __name__ == "__main__":
    key = jax.random.PRNGKey(0)
    kx, kp = jax.random.split(key)
    x = jax.random.normal(kx, (B, L, D_MODEL), jnp.float32)
    params = make_params(kp)

    out = jax.block_until_ready(mamba_block(x, params))
    ref = jax.block_until_ready(mamba_block_ref(x, params))

    assert out.shape == (B, L, D_MODEL)
    assert jnp.allclose(out, ref, rtol=1e-2, atol=1e-2), (
        f"max abs diff {jnp.max(jnp.abs(out - ref))}")

    print("KERNEL_OK")
</pallas_src>

<mosaic_0001>
module attributes {stable_mosaic.version = 11 : i64} {
  func.func @mamba_block_kernel(%arg0: memref<16x32xf32, #tpu.memory_space<vmem>>, %arg1: memref<1x32xf32, #tpu.memory_space<vmem>>, %arg2: memref<32x128xf32, #tpu.memory_space<vmem>>, %arg3: memref<4x64xf32, #tpu.memory_space<vmem>>, %arg4: memref<1x64xf32, #tpu.memory_space<vmem>>, %arg5: memref<64x96xf32, #tpu.memory_space<vmem>>, %arg6: memref<1x64xf32, #tpu.memory_space<vmem>>, %arg7: memref<16x64xf32, #tpu.memory_space<vmem>>, %arg8: memref<1x64xf32, #tpu.memory_space<vmem>>, %arg9: memref<64x32xf32, #tpu.memory_space<vmem>>, %arg10: memref<16x32xf32, #tpu.memory_space<vmem>>, %arg11: memref<16x16x64xf32, #tpu.memory_space<vmem>>) attributes {dimension_semantics = [], scalar_prefetch = 0 : i64, scratch_operands = 1 : i64, tpu.core_type = #tpu.core_type<tc>} {
    %c0 = arith.constant 0 : index
    %c0_0 = arith.constant 0 : index
    %0 = vector.load %arg0[%c0, %c0_0] : memref<16x32xf32, #tpu.memory_space<vmem>>, vector<16x32xf32>
    %1 = arith.mulf %0, %0 : vector<16x32xf32>
    %cst = arith.constant dense<0.000000e+00> : vector<16xf32>
    %2 = vector.multi_reduction <add>, %1, %cst [1] : vector<16x32xf32> to vector<16xf32>
    %3 = vector.shape_cast %2 : vector<16xf32> to vector<16x1xf32>
    %cst_1 = arith.constant 3.200000e+01 : f32
    %4 = vector.broadcast %cst_1 : f32 to vector<16x1xf32>
    %5 = arith.divf %3, %4 : vector<16x1xf32>
    %cst_2 = arith.constant 9.99999974E-6 : f32
    %6 = vector.broadcast %cst_2 : f32 to vector<16x1xf32>
    %7 = arith.addf %5, %6 : vector<16x1xf32>
    %8 = math.rsqrt %7 : vector<16x1xf32>
    %9 = vector.broadcast %8 : vector<16x1xf32> to vector<16x32xf32>
    %10 = arith.mulf %0, %9 : vector<16x32xf32>
    %c0_3 = arith.constant 0 : index
    %c0_4 = arith.constant 0 : index
    %11 = vector.load %arg1[%c0_3, %c0_4] : memref<1x32xf32, #tpu.memory_space<vmem>>, vector<1x32xf32>
    %12 = vector.broadcast %11 : vector<1x32xf32> to vector<16x32xf32>
    %13 = arith.mulf %10, %12 : vector<16x32xf32>
    %c0_5 = arith.constant 0 : index
    %c0_6 = arith.constant 0 : index
    %14 = vector.load %arg2[%c0_5, %c0_6] : memref<32x128xf32, #tpu.memory_space<vmem>>, vector<32x128xf32>
    %cst_7 = arith.constant dense<0.000000e+00> : vector<16x128xf32>
    %15 = tpu.matmul %13, %14, %cst_7 {dimension_numbers = #tpu.dot_dimension_numbers<[1], [0], [0], [1], [0, 0, 1, 1], [], []>} : vector<16x32xf32>, vector<32x128xf32>, vector<16x128xf32> -> vector<16x128xf32>
    %16 = vector.extract_strided_slice %15 {offsets = [0, 0], sizes = [16, 64], strides = [1, 1]} : vector<16x128xf32> to vector<16x64xf32>
    %17 = vector.extract_strided_slice %15 {offsets = [0, 64], sizes = [16, 64], strides = [1, 1]} : vector<16x128xf32> to vector<16x64xf32>
    %c0_8 = arith.constant 0 : index
    %c0_9 = arith.constant 0 : index
    %18 = vector.load %arg3[%c0_8, %c0_9] : memref<4x64xf32, #tpu.memory_space<vmem>>, vector<4x64xf32>
    %19 = vector.extract_strided_slice %18 {offsets = [3, 0], sizes = [1, 64], strides = [1, 1]} : vector<4x64xf32> to vector<1x64xf32>
    %20 = vector.broadcast %19 : vector<1x64xf32> to vector<16x64xf32>
    %21 = arith.mulf %16, %20 : vector<16x64xf32>
    %c0_10 = arith.constant 0 : index
    %c0_11 = arith.constant 0 : index
    %22 = vector.load %arg4[%c0_10, %c0_11] : memref<1x64xf32, #tpu.memory_space<vmem>>, vector<1x64xf32>
    %23 = vector.broadcast %22 : vector<1x64xf32> to vector<16x64xf32>
    %24 = arith.addf %21, %23 : vector<16x64xf32>
    %25 = vector.extract_strided_slice %16 {offsets = [0, 0], sizes = [10, 64], strides = [1, 1]} : vector<16x64xf32> to vector<10x64xf32>
    %26 = vector.extract_strided_slice %18 {offsets = [0, 0], sizes = [1, 64], strides = [1, 1]} : vector<4x64xf32> to vector<1x64xf32>
    %27 = vector.broadcast %26 : vector<1x64xf32> to vector<10x64xf32>
    %28 = arith.mulf %25, %27 : vector<10x64xf32>
    %cst_12 = arith.constant 0.000000e+00 : f32
    %29 = vector.broadcast %cst_12 : f32 to vector<6x64xf32>
    %30 = tpu.concatenate %29, %28 in 0 : vector<6x64xf32>, vector<10x64xf32> -> vector<16x64xf32>
    %31 = arith.addf %24, %30 : vector<16x64xf32>
    %32 = vector.extract_strided_slice %16 {offsets = [0, 0], sizes = [12, 64], strides = [1, 1]} : vector<16x64xf32> to vector<12x64xf32>
    %33 = vector.extract_strided_slice %18 {offsets = [1, 0], sizes = [1, 64], strides = [1, 1]} : vector<4x64xf32> to vector<1x64xf32>
    %34 = vector.broadcast %33 : vector<1x64xf32> to vector<12x64xf32>
    %35 = arith.mulf %32, %34 : vector<12x64xf32>
    %cst_13 = arith.constant 0.000000e+00 : f32
    %36 = vector.broadcast %cst_13 : f32 to vector<4x64xf32>
    %37 = tpu.concatenate %36, %35 in 0 : vector<4x64xf32>, vector<12x64xf32> -> vector<16x64xf32>
    %38 = arith.addf %31, %37 : vector<16x64xf32>
    %39 = vector.extract_strided_slice %16 {offsets = [0, 0], sizes = [14, 64], strides = [1, 1]} : vector<16x64xf32> to vector<14x64xf32>
    %40 = vector.extract_strided_slice %18 {offsets = [2, 0], sizes = [1, 64], strides = [1, 1]} : vector<4x64xf32> to vector<1x64xf32>
    %41 = vector.broadcast %40 : vector<1x64xf32> to vector<14x64xf32>
    %42 = arith.mulf %39, %41 : vector<14x64xf32>
    %cst_14 = arith.constant 0.000000e+00 : f32
    %43 = vector.broadcast %cst_14 : f32 to vector<2x64xf32>
    %44 = tpu.concatenate %43, %42 in 0 : vector<2x64xf32>, vector<14x64xf32> -> vector<16x64xf32>
    %45 = arith.addf %38, %44 : vector<16x64xf32>
    %cst_15 = arith.constant 5.000000e-01 : f32
    %46 = vector.broadcast %cst_15 : f32 to vector<16x64xf32>
    %47 = arith.mulf %46, %45 : vector<16x64xf32>
    %cst_16 = arith.constant 5.000000e-01 : f32
    %48 = vector.broadcast %cst_16 : f32 to vector<16x64xf32>
    %49 = arith.mulf %48, %45 : vector<16x64xf32>
    %50 = math.tanh %49 : vector<16x64xf32>
    %cst_17 = arith.constant 1.000000e+00 : f32
    %51 = vector.broadcast %cst_17 : f32 to vector<16x64xf32>
    %52 = arith.addf %51, %50 : vector<16x64xf32>
    %53 = arith.mulf %47, %52 : vector<16x64xf32>
    %c0_18 = arith.constant 0 : index
    %c0_19 = arith.constant 0 : index
    %54 = vector.load %arg5[%c0_18, %c0_19] : memref<64x96xf32, #tpu.memory_space<vmem>>, vector<64x96xf32>
    %cst_20 = arith.constant dense<0.000000e+00> : vector<16x96xf32>
    %55 = tpu.matmul %53, %54, %cst_20 {dimension_numbers = #tpu.dot_dimension_numbers<[1], [0], [0], [1], [0, 0, 1, 1], [], []>} : vector<16x64xf32>, vector<64x96xf32>, vector<16x96xf32> -> vector<16x96xf32>
    %56 = vector.extract_strided_slice %55 {offsets = [0, 0], sizes = [16, 64], strides = [1, 1]} : vector<16x96xf32> to vector<16x64xf32>
    %c0_21 = arith.constant 0 : index
    %c0_22 = arith.constant 0 : index
    %57 = vector.load %arg6[%c0_21, %c0_22] : memref<1x64xf32, #tpu.memory_space<vmem>>, vector<1x64xf32>
    %58 = vector.broadcast %57 : vector<1x64xf32> to vector<16x64xf32>
    %59 = arith.addf %56, %58 : vector<16x64xf32>
    %cst_23 = arith.constant 0.000000e+00 : f32
    %60 = vector.broadcast %cst_23 : f32 to vector<16x64xf32>
    %61 = arith.maximumf %59, %60 : vector<16x64xf32>
    %62 = math.absf %59 : vector<16x64xf32>
    %cst_24 = arith.constant 0.000000e+00 : f32
    %63 = vector.broadcast %cst_24 : f32 to vector<16x64xf32>
    %64 = arith.subf %63, %62 : vector<16x64xf32>
    %65 = math.exp %64 : vector<16x64xf32>
    %66 = math.log1p %65 : vector<16x64xf32>
    %67 = arith.addf %61, %66 : vector<16x64xf32>
    %68 = vector.extract_strided_slice %55 {offsets = [0, 64], sizes = [16, 16], strides = [1, 1]} : vector<16x96xf32> to vector<16x16xf32>
    %69 = tpu.transpose %68, [1, 0] : vector<16x16xf32> -> vector<16x16xf32>
    %70 = vector.extract_strided_slice %55 {offsets = [0, 80], sizes = [16, 16], strides = [1, 1]} : vector<16x96xf32> to vector<16x16xf32>
    %71 = tpu.transpose %70, [1, 0] : vector<16x16xf32> -> vector<16x16xf32>
    %c0_25 = arith.constant 0 : index
    %c0_26 = arith.constant 0 : index
    %72 = vector.load %arg7[%c0_25, %c0_26] : memref<16x64xf32, #tpu.memory_space<vmem>>, vector<16x64xf32>
    %73 = vector.shape_cast %67 : vector<16x64xf32> to vector<16x1x64xf32>
    %74 = vector.shape_cast %72 : vector<16x64xf32> to vector<1x16x64xf32>
    %75 = vector.broadcast %73 : vector<16x1x64xf32> to vector<16x16x64xf32>
    %76 = vector.broadcast %74 : vector<1x16x64xf32> to vector<16x16x64xf32>
    %77 = arith.mulf %75, %76 : vector<16x16x64xf32>
    %78 = math.exp %77 : vector<16x16x64xf32>
    %c0_27 = arith.constant 0 : index
    %c0_28 = arith.constant 0 : index
    %c0_29 = arith.constant 0 : index
    %79 = vector.load %arg11[%c0_27, %c0_28, %c0_29] : memref<16x16x64xf32, #tpu.memory_space<vmem>>, vector<16x16x64xf32>
    tpu.vector_store %arg11[%c0_27, %c0_28, %c0_29], %78 {strides = array<i32>} : memref<16x16x64xf32, #tpu.memory_space<vmem>>, vector<16x16x64xf32>,
    %80 = arith.mulf %67, %53 : vector<16x64xf32>
    %cst_30 = arith.constant 0.000000e+00 : f32
    %81 = vector.broadcast %cst_30 : f32 to vector<16x64xf32>
    %cst_31 = arith.constant 0.000000e+00 : f32
    %82 = vector.broadcast %cst_31 : f32 to vector<16x64xf32>
    %83 = vector.extract_strided_slice %80 {offsets = [0, 0], sizes = [1, 64], strides = [1, 1]} : vector<16x64xf32> to vector<1x64xf32>
    %84 = vector.extract_strided_slice %69 {offsets = [0, 0], sizes = [16, 1], strides = [1, 1]} : vector<16x16xf32> to vector<16x1xf32>
    %85 = vector.broadcast %83 : vector<1x64xf32> to vector<16x64xf32>
    %86 = vector.broadcast %84 : vector<16x1xf32> to vector<16x64xf32>
    %87 = arith.mulf %85, %86 : vector<16x64xf32>
    %c0_32 = arith.constant 0 : index
    %c0_33 = arith.constant 0 : index
    %c0_34 = arith.constant 0 : index
    %88 = vector.load %arg11[%c0_32, %c0_33, %c0_34] : memref<16x16x64xf32, #tpu.memory_space<vmem>>, vector<1x16x64xf32>
    %89 = vector.shape_cast %88 : vector<1x16x64xf32> to vector<16x64xf32>
    %90 = arith.mulf %89, %81 : vector<16x64xf32>
    %91 = arith.addf %90, %87 : vector<16x64xf32>
    %92 = vector.extract_strided_slice %71 {offsets = [0, 0], sizes = [16, 1], strides = [1, 1]} : vector<16x16xf32> to vector<16x1xf32>
    %93 = vector.broadcast %92 : vector<16x1xf32> to vector<16x64xf32>
    %94 = arith.mulf %91, %93 : vector<16x64xf32>
    %cst_35 = arith.constant dense<0.000000e+00> : vector<64xf32>
    %95 = vector.multi_reduction <add>, %94, %cst_35 [0] : vector<16x64xf32> to vector<64xf32>
    %96 = vector.shape_cast %95 : vector<64xf32> to vector<1x64xf32>
    %97 = vector.extract_strided_slice %80 {offsets = [1, 0], sizes = [1, 64], strides = [1, 1]} : vector<16x64xf32> to vector<1x64xf32>
    %98 = vector.extract_strided_slice %69 {offsets = [0, 1], sizes = [16, 1], strides = [1, 1]} : vector<16x16xf32> to vector<16x1xf32>
    %99 = vector.broadcast %97 : vector<1x64xf32> to vector<16x64xf32>
    %100 = vector.broadcast %98 : vector<16x1xf32> to vector<16x64xf32>
    %101 = arith.mulf %99, %100 : vector<16x64xf32>
    %c1 = arith.constant 1 : index
    %c0_36 = arith.constant 0 : index
    %c0_37 = arith.constant 0 : index
    %102 = vector.load %arg11[%c1, %c0_36, %c0_37] : memref<16x16x64xf32, #tpu.memory_space<vmem>>, vector<1x16x64xf32>
    %103 = vector.shape_cast %102 : vector<1x16x64xf32> to vector<16x64xf32>
    %104 = arith.mulf %103, %82 : vector<16x64xf32>
    %105 = arith.addf %104, %101 : vector<16x64xf32>
    %106 = vector.extract_strided_slice %71 {offsets = [0, 1], sizes = [16, 1], strides = [1, 1]} : vector<16x16xf32> to vector<16x1xf32>
    %107 = vector.broadcast %106 : vector<16x1xf32> to vector<16x64xf32>
    %108 = arith.mulf %105, %107 : vector<16x64xf32>
    %cst_38 = arith.constant dense<0.000000e+00> : vector<64xf32>
    %109 = vector.multi_reduction <add>, %108, %cst_38 [0] : vector<16x64xf32> to vector<64xf32>
    %110 = vector.shape_cast %109 : vector<64xf32> to vector<1x64xf32>
    %111 = vector.extract_strided_slice %80 {offsets = [2, 0], sizes = [1, 64], strides = [1, 1]} : vector<16x64xf32> to vector<1x64xf32>
    %112 = vector.extract_strided_slice %69 {offsets = [0, 2], sizes = [16, 1], strides = [1, 1]} : vector<16x16xf32> to vector<16x1xf32>
    %113 = vector.broadcast %111 : vector<1x64xf32> to vector<16x64xf32>
    %114 = vector.broadcast %112 : vector<16x1xf32> to vector<16x64xf32>
    %115 = arith.mulf %113, %114 : vector<16x64xf32>
    %c2 = arith.constant 2 : index
    %c0_39 = arith.constant 0 : index
    %c0_40 = arith.constant 0 : index
    %116 = vector.load %arg11[%c2, %c0_39, %c0_40] : memref<16x16x64xf32, #tpu.memory_space<vmem>>, vector<1x16x64xf32>
    %117 = vector.shape_cast %116 : vector<1x16x64xf32> to vector<16x64xf32>
    %118 = arith.mulf %117, %91 : vector<16x64xf32>
    %119 = arith.addf %118, %115 : vector<16x64xf32>
    %120 = vector.extract_strided_slice %71 {offsets = [0, 2], sizes = [16, 1], strides = [1, 1]} : vector<16x16xf32> to vector<16x1xf32>
    %121 = vector.broadcast %120 : vector<16x1xf32> to vector<16x64xf32>
    %122 = arith.mulf %119, %121 : vector<16x64xf32>
    %cst_41 = arith.constant dense<0.000000e+00> : vector<64xf32>
    %123 = vector.multi_reduction <add>, %122, %cst_41 [0] : vector<16x64xf32> to vector<64xf32>
    %124 = vector.shape_cast %123 : vector<64xf32> to vector<1x64xf32>
    %125 = vector.extract_strided_slice %80 {offsets = [3, 0], sizes = [1, 64], strides = [1, 1]} : vector<16x64xf32> to vector<1x64xf32>
    %126 = vector.extract_strided_slice %69 {offsets = [0, 3], sizes = [16, 1], strides = [1, 1]} : vector<16x16xf32> to vector<16x1xf32>
    %127 = vector.broadcast %125 : vector<1x64xf32> to vector<16x64xf32>
    %128 = vector.broadcast %126 : vector<16x1xf32> to vector<16x64xf32>
    %129 = arith.mulf %127, %128 : vector<16x64xf32>
    %c3 = arith.constant 3 : index
    %c0_42 = arith.constant 0 : index
    %c0_43 = arith.constant 0 : index
    %130 = vector.load %arg11[%c3, %c0_42, %c0_43] : memref<16x16x64xf32, #tpu.memory_space<vmem>>, vector<1x16x64xf32>
    %131 = vector.shape_cast %130 : vector<1x16x64xf32> to vector<16x64xf32>
    %132 = arith.mulf %131, %105 : vector<16x64xf32>
    %133 = arith.addf %132, %129 : vector<16x64xf32>
    %134 = vector.extract_strided_slice %71 {offsets = [0, 3], sizes = [16, 1], strides = [1, 1]} : vector<16x16xf32> to vector<16x1xf32>
    %135 = vector.broadcast %134 : vector<16x1xf32> to vector<16x64xf32>
    %136 = arith.mulf %133, %135 : vector<16x64xf32>
    %cst_44 = arith.constant dense<0.000000e+00> : vector<64xf32>
    %137 = vector.multi_reduction <add>, %136, %cst_44 [0] : vector<16x64xf32> to vector<64xf32>
    %138 = vector.shape_cast %137 : vector<64xf32> to vector<1x64xf32>
    %139 = vector.extract_strided_slice %80 {offsets = [4, 0], sizes = [1, 64], strides = [1, 1]} : vector<16x64xf32> to vector<1x64xf32>
    %140 = vector.extract_strided_slice %69 {offsets = [0, 4], sizes = [16, 1], strides = [1, 1]} : vector<16x16xf32> to vector<16x1xf32>
    %141 = vector.broadcast %139 : vector<1x64xf32> to vector<16x64xf32>
    %142 = vector.broadcast %140 : vector<16x1xf32> to vector<16x64xf32>
    %143 = arith.mulf %141, %142 : vector<16x64xf32>
    %c4 = arith.constant 4 : index
    %c0_45 = arith.constant 0 : index
    %c0_46 = arith.constant 0 : index
    %144 = vector.load %arg11[%c4, %c0_45, %c0_46] : memref<16x16x64xf32, #tpu.memory_space<vmem>>, vector<1x16x64xf32>
    %145 = vector.shape_cast %144 : vector<1x16x64xf32> to vector<16x64xf32>
    %146 = arith.mulf %145, %119 : vector<16x64xf32>
    %147 = arith.addf %146, %143 : vector<16x64xf32>
    %148 = vector.extract_strided_slice %71 {offsets = [0, 4], sizes = [16, 1], strides = [1, 1]} : vector<16x16xf32> to vector<16x1xf32>
    %149 = vector.broadcast %148 : vector<16x1xf32> to vector<16x64xf32>
    %150 = arith.mulf %147, %149 : vector<16x64xf32>
    %cst_47 = arith.constant dense<0.000000e+00> : vector<64xf32>
    %151 = vector.multi_reduction <add>, %150, %cst_47 [0] : vector<16x64xf32> to vector<64xf32>
    %152 = vector.shape_cast %151 : vector<64xf32> to vector<1x64xf32>
    %153 = vector.extract_strided_slice %80 {offsets = [5, 0], sizes = [1, 64], strides = [1, 1]} : vector<16x64xf32> to vector<1x64xf32>
    %154 = vector.extract_strided_slice %69 {offsets = [0, 5], sizes = [16, 1], strides = [1, 1]} : vector<16x16xf32> to vector<16x1xf32>
    %155 = vector.broadcast %153 : vector<1x64xf32> to vector<16x64xf32>
    %156 = vector.broadcast %154 : vector<16x1xf32> to vector<16x64xf32>
    %157 = arith.mulf %155, %156 : vector<16x64xf32>
    %c5 = arith.constant 5 : index
    %c0_48 = arith.constant 0 : index
    %c0_49 = arith.constant 0 : index
    %158 = vector.load %arg11[%c5, %c0_48, %c0_49] : memref<16x16x64xf32, #tpu.memory_space<vmem>>, vector<1x16x64xf32>
    %159 = vector.shape_cast %158 : vector<1x16x64xf32> to vector<16x64xf32>
    %160 = arith.mulf %159, %133 : vector<16x64xf32>
    %161 = arith.addf %160, %157 : vector<16x64xf32>
    %162 = vector.extract_strided_slice %71 {offsets = [0, 5], sizes = [16, 1], strides = [1, 1]} : vector<16x16xf32> to vector<16x1xf32>
    %163 = vector.broadcast %162 : vector<16x1xf32> to vector<16x64xf32>
    %164 = arith.mulf %161, %163 : vector<16x64xf32>
    %cst_50 = arith.constant dense<0.000000e+00> : vector<64xf32>
    %165 = vector.multi_reduction <add>, %164, %cst_50 [0] : vector<16x64xf32> to vector<64xf32>
    %166 = vector.shape_cast %165 : vector<64xf32> to vector<1x64xf32>
    %167 = vector.extract_strided_slice %80 {offsets = [6, 0], sizes = [1, 64], strides = [1, 1]} : vector<16x64xf32> to vector<1x64xf32>
    %168 = vector.extract_strided_slice %69 {offsets = [0, 6], sizes = [16, 1], strides = [1, 1]} : vector<16x16xf32> to vector<16x1xf32>
    %169 = vector.broadcast %167 : vector<1x64xf32> to vector<16x64xf32>
    %170 = vector.broadcast %168 : vector<16x1xf32> to vector<16x64xf32>
    %171 = arith.mulf %169, %170 : vector<16x64xf32>
    %c6 = arith.constant 6 : index
    %c0_51 = arith.constant 0 : index
    %c0_52 = arith.constant 0 : index
    %172 = vector.load %arg11[%c6, %c0_51, %c0_52] : memref<16x16x64xf32, #tpu.memory_space<vmem>>, vector<1x16x64xf32>
    %173 = vector.shape_cast %172 : vector<1x16x64xf32> to vector<16x64xf32>
    %174 = arith.mulf %173, %147 : vector<16x64xf32>
    %175 = arith.addf %174, %171 : vector<16x64xf32>
    %176 = vector.extract_strided_slice %71 {offsets = [0, 6], sizes = [16, 1], strides = [1, 1]} : vector<16x16xf32> to vector<16x1xf32>
    %177 = vector.broadcast %176 : vector<16x1xf32> to vector<16x64xf32>
    %178 = arith.mulf %175, %177 : vector<16x64xf32>
    %cst_53 = arith.constant dense<0.000000e+00> : vector<64xf32>
    %179 = vector.multi_reduction <add>, %178, %cst_53 [0] : vector<16x64xf32> to vector<64xf32>
    %180 = vector.shape_cast %179 : vector<64xf32> to vector<1x64xf32>
    %181 = vector.extract_strided_slice %80 {offsets = [7, 0], sizes = [1, 64], strides = [1, 1]} : vector<16x64xf32> to vector<1x64xf32>
    %182 = vector.extract_strided_slice %69 {offsets = [0, 7], sizes = [16, 1], strides = [1, 1]} : vector<16x16xf32> to vector<16x1xf32>
    %183 = vector.broadcast %181 : vector<1x64xf32> to vector<16x64xf32>
    %184 = vector.broadcast %182 : vector<16x1xf32> to vector<16x64xf32>
    %185 = arith.mulf %183, %184 : vector<16x64xf32>
    %c7 = arith.constant 7 : index
    %c0_54 = arith.constant 0 : index
    %c0_55 = arith.constant 0 : index
    %186 = vector.load %arg11[%c7, %c0_54, %c0_55] : memref<16x16x64xf32, #tpu.memory_space<vmem>>, vector<1x16x64xf32>
    %187 = vector.shape_cast %186 : vector<1x16x64xf32> to vector<16x64xf32>
    %188 = arith.mulf %187, %161 : vector<16x64xf32>
    %189 = arith.addf %188, %185 : vector<16x64xf32>
    %190 = vector.extract_strided_slice %71 {offsets = [0, 7], sizes = [16, 1], strides = [1, 1]} : vector<16x16xf32> to vector<16x1xf32>
    %191 = vector.broadcast %190 : vector<16x1xf32> to vector<16x64xf32>
    %192 = arith.mulf %189, %191 : vector<16x64xf32>
    %cst_56 = arith.constant dense<0.000000e+00> : vector<64xf32>
    %193 = vector.multi_reduction <add>, %192, %cst_56 [0] : vector<16x64xf32> to vector<64xf32>
    %194 = vector.shape_cast %193 : vector<64xf32> to vector<1x64xf32>
    %195 = vector.extract_strided_slice %80 {offsets = [8, 0], sizes = [1, 64], strides = [1, 1]} : vector<16x64xf32> to vector<1x64xf32>
    %196 = vector.extract_strided_slice %69 {offsets = [0, 8], sizes = [16, 1], strides = [1, 1]} : vector<16x16xf32> to vector<16x1xf32>
    %197 = vector.broadcast %195 : vector<1x64xf32> to vector<16x64xf32>
    %198 = vector.broadcast %196 : vector<16x1xf32> to vector<16x64xf32>
    %199 = arith.mulf %197, %198 : vector<16x64xf32>
    %c8 = arith.constant 8 : index
    %c0_57 = arith.constant 0 : index
    %c0_58 = arith.constant 0 : index
    %200 = vector.load %arg11[%c8, %c0_57, %c0_58] : memref<16x16x64xf32, #tpu.memory_space<vmem>>, vector<1x16x64xf32>
    %201 = vector.shape_cast %200 : vector<1x16x64xf32> to vector<16x64xf32>
    %202 = arith.mulf %201, %175 : vector<16x64xf32>
    %203 = arith.addf %202, %199 : vector<16x64xf32>
    %204 = vector.extract_strided_slice %71 {offsets = [0, 8], sizes = [16, 1], strides = [1, 1]} : vector<16x16xf32> to vector<16x1xf32>
    %205 = vector.broadcast %204 : vector<16x1xf32> to vector<16x64xf32>
    %206 = arith.mulf %203, %205 : vector<16x64xf32>
    %cst_59 = arith.constant dense<0.000000e+00> : vector<64xf32>
    %207 = vector.multi_reduction <add>, %206, %cst_59 [0] : vector<16x64xf32> to vector<64xf32>
    %208 = vector.shape_cast %207 : vector<64xf32> to vector<1x64xf32>
    %209 = vector.extract_strided_slice %80 {offsets = [9, 0], sizes = [1, 64], strides = [1, 1]} : vector<16x64xf32> to vector<1x64xf32>
    %210 = vector.extract_strided_slice %69 {offsets = [0, 9], sizes = [16, 1], strides = [1, 1]} : vector<16x16xf32> to vector<16x1xf32>
    %211 = vector.broadcast %209 : vector<1x64xf32> to vector<16x64xf32>
    %212 = vector.broadcast %210 : vector<16x1xf32> to vector<16x64xf32>
    %213 = arith.mulf %211, %212 : vector<16x64xf32>
    %c9 = arith.constant 9 : index
    %c0_60 = arith.constant 0 : index
    %c0_61 = arith.constant 0 : index
    %214 = vector.load %arg11[%c9, %c0_60, %c0_61] : memref<16x16x64xf32, #tpu.memory_space<vmem>>, vector<1x16x64xf32>
    %215 = vector.shape_cast %214 : vector<1x16x64xf32> to vector<16x64xf32>
    %216 = arith.mulf %215, %189 : vector<16x64xf32>
    %217 = arith.addf %216, %213 : vector<16x64xf32>
    %218 = vector.extract_strided_slice %71 {offsets = [0, 9], sizes = [16, 1], strides = [1, 1]} : vector<16x16xf32> to vector<16x1xf32>
    %219 = vector.broadcast %218 : vector<16x1xf32> to vector<16x64xf32>
    %220 = arith.mulf %217, %219 : vector<16x64xf32>
    %cst_62 = arith.constant dense<0.000000e+00> : vector<64xf32>
    %221 = vector.multi_reduction <add>, %220, %cst_62 [0] : vector<16x64xf32> to vector<64xf32>
    %222 = vector.shape_cast %221 : vector<64xf32> to vector<1x64xf32>
    %223 = vector.extract_strided_slice %80 {offsets = [10, 0], sizes = [1, 64], strides = [1, 1]} : vector<16x64xf32> to vector<1x64xf32>
    %224 = vector.extract_strided_slice %69 {offsets = [0, 10], sizes = [16, 1], strides = [1, 1]} : vector<16x16xf32> to vector<16x1xf32>
    %225 = vector.broadcast %223 : vector<1x64xf32> to vector<16x64xf32>
    %226 = vector.broadcast %224 : vector<16x1xf32> to vector<16x64xf32>
    %227 = arith.mulf %225, %226 : vector<16x64xf32>
    %c10 = arith.constant 10 : index
    %c0_63 = arith.constant 0 : index
    %c0_64 = arith.constant 0 : index
    %228 = vector.load %arg11[%c10, %c0_63, %c0_64] : memref<16x16x64xf32, #tpu.memory_space<vmem>>, vector<1x16x64xf32>
    %229 = vector.shape_cast %228 : vector<1x16x64xf32> to vector<16x64xf32>
    %230 = arith.mulf %229, %203 : vector<16x64xf32>
    %231 = arith.addf %230, %227 : vector<16x64xf32>
    %232 = vector.extract_strided_slice %71 {offsets = [0, 10], sizes = [16, 1], strides = [1, 1]} : vector<16x16xf32> to vector<16x1xf32>
    %233 = vector.broadcast %232 : vector<16x1xf32> to vector<16x64xf32>
    %234 = arith.mulf %231, %233 : vector<16x64xf32>
    %cst_65 = arith.constant dense<0.000000e+00> : vector<64xf32>
    %235 = vector.multi_reduction <add>, %234, %cst_65 [0] : vector<16x64xf32> to vector<64xf32>
    %236 = vector.shape_cast %235 : vector<64xf32> to vector<1x64xf32>
    %237 = vector.extract_strided_slice %80 {offsets = [11, 0], sizes = [1, 64], strides = [1, 1]} : vector<16x64xf32> to vector<1x64xf32>
    %238 = vector.extract_strided_slice %69 {offsets = [0, 11], sizes = [16, 1], strides = [1, 1]} : vector<16x16xf32> to vector<16x1xf32>
    %239 = vector.broadcast %237 : vector<1x64xf32> to vector<16x64xf32>
    %240 = vector.broadcast %238 : vector<16x1xf32> to vector<16x64xf32>
    %241 = arith.mulf %239, %240 : vector<16x64xf32>
    %c11 = arith.constant 11 : index
    %c0_66 = arith.constant 0 : index
    %c0_67 = arith.constant 0 : index
    %242 = vector.load %arg11[%c11, %c0_66, %c0_67] : memref<16x16x64xf32, #tpu.memory_space<vmem>>, vector<1x16x64xf32>
    %243 = vector.shape_cast %242 : vector<1x16x64xf32> to vector<16x64xf32>
    %244 = arith.mulf %243, %217 : vector<16x64xf32>
    %245 = arith.addf %244, %241 : vector<16x64xf32>
    %246 = vector.extract_strided_slice %71 {offsets = [0, 11], sizes = [16, 1], strides = [1, 1]} : vector<16x16xf32> to vector<16x1xf32>
    %247 = vector.broadcast %246 : vector<16x1xf32> to vector<16x64xf32>
    %248 = arith.mulf %245, %247 : vector<16x64xf32>
    %cst_68 = arith.constant dense<0.000000e+00> : vector<64xf32>
    %249 = vector.multi_reduction <add>, %248, %cst_68 [0] : vector<16x64xf32> to vector<64xf32>
    %250 = vector.shape_cast %249 : vector<64xf32> to vector<1x64xf32>
    %251 = vector.extract_strided_slice %80 {offsets = [12, 0], sizes = [1, 64], strides = [1, 1]} : vector<16x64xf32> to vector<1x64xf32>
    %252 = vector.extract_strided_slice %69 {offsets = [0, 12], sizes = [16, 1], strides = [1, 1]} : vector<16x16xf32> to vector<16x1xf32>
    %253 = vector.broadcast %251 : vector<1x64xf32> to vector<16x64xf32>
    %254 = vector.broadcast %252 : vector<16x1xf32> to vector<16x64xf32>
    %255 = arith.mulf %253, %254 : vector<16x64xf32>
    %c12 = arith.constant 12 : index
    %c0_69 = arith.constant 0 : index
    %c0_70 = arith.constant 0 : index
    %256 = vector.load %arg11[%c12, %c0_69, %c0_70] : memref<16x16x64xf32, #tpu.memory_space<vmem>>, vector<1x16x64xf32>
    %257 = vector.shape_cast %256 : vector<1x16x64xf32> to vector<16x64xf32>
    %258 = arith.mulf %257, %231 : vector<16x64xf32>
    %259 = arith.addf %258, %255 : vector<16x64xf32>
    %260 = vector.extract_strided_slice %71 {offsets = [0, 12], sizes = [16, 1], strides = [1, 1]} : vector<16x16xf32> to vector<16x1xf32>
    %261 = vector.broadcast %260 : vector<16x1xf32> to vector<16x64xf32>
    %262 = arith.mulf %259, %261 : vector<16x64xf32>
    %cst_71 = arith.constant dense<0.000000e+00> : vector<64xf32>
    %263 = vector.multi_reduction <add>, %262, %cst_71 [0] : vector<16x64xf32> to vector<64xf32>
    %264 = vector.shape_cast %263 : vector<64xf32> to vector<1x64xf32>
    %265 = vector.extract_strided_slice %80 {offsets = [13, 0], sizes = [1, 64], strides = [1, 1]} : vector<16x64xf32> to vector<1x64xf32>
    %266 = vector.extract_strided_slice %69 {offsets = [0, 13], sizes = [16, 1], strides = [1, 1]} : vector<16x16xf32> to vector<16x1xf32>
    %267 = vector.broadcast %265 : vector<1x64xf32> to vector<16x64xf32>
    %268 = vector.broadcast %266 : vector<16x1xf32> to vector<16x64xf32>
    %269 = arith.mulf %267, %268 : vector<16x64xf32>
    %c13 = arith.constant 13 : index
    %c0_72 = arith.constant 0 : index
    %c0_73 = arith.constant 0 : index
    %270 = vector.load %arg11[%c13, %c0_72, %c0_73] : memref<16x16x64xf32, #tpu.memory_space<vmem>>, vector<1x16x64xf32>
    %271 = vector.shape_cast %270 : vector<1x16x64xf32> to vector<16x64xf32>
    %272 = arith.mulf %271, %245 : vector<16x64xf32>
    %273 = arith.addf %272, %269 : vector<16x64xf32>
    %274 = vector.extract_strided_slice %71 {offsets = [0, 13], sizes = [16, 1], strides = [1, 1]} : vector<16x16xf32> to vector<16x1xf32>
    %275 = vector.broadcast %274 : vector<16x1xf32> to vector<16x64xf32>
    %276 = arith.mulf %273, %275 : vector<16x64xf32>
    %cst_74 = arith.constant dense<0.000000e+00> : vector<64xf32>
    %277 = vector.multi_reduction <add>, %276, %cst_74 [0] : vector<16x64xf32> to vector<64xf32>
    %278 = vector.shape_cast %277 : vector<64xf32> to vector<1x64xf32>
    %279 = vector.extract_strided_slice %80 {offsets = [14, 0], sizes = [1, 64], strides = [1, 1]} : vector<16x64xf32> to vector<1x64xf32>
    %280 = vector.extract_strided_slice %69 {offsets = [0, 14], sizes = [16, 1], strides = [1, 1]} : vector<16x16xf32> to vector<16x1xf32>
    %281 = vector.broadcast %279 : vector<1x64xf32> to vector<16x64xf32>
    %282 = vector.broadcast %280 : vector<16x1xf32> to vector<16x64xf32>
    %283 = arith.mulf %281, %282 : vector<16x64xf32>
    %c14 = arith.constant 14 : index
    %c0_75 = arith.constant 0 : index
    %c0_76 = arith.constant 0 : index
    %284 = vector.load %arg11[%c14, %c0_75, %c0_76] : memref<16x16x64xf32, #tpu.memory_space<vmem>>, vector<1x16x64xf32>
    %285 = vector.shape_cast %284 : vector<1x16x64xf32> to vector<16x64xf32>
    %286 = arith.mulf %285, %259 : vector<16x64xf32>
    %287 = arith.addf %286, %283 : vector<16x64xf32>
    %288 = vector.extract_strided_slice %71 {offsets = [0, 14], sizes = [16, 1], strides = [1, 1]} : vector<16x16xf32> to vector<16x1xf32>
    %289 = vector.broadcast %288 : vector<16x1xf32> to vector<16x64xf32>
    %290 = arith.mulf %287, %289 : vector<16x64xf32>
    %cst_77 = arith.constant dense<0.000000e+00> : vector<64xf32>
    %291 = vector.multi_reduction <add>, %290, %cst_77 [0] : vector<16x64xf32> to vector<64xf32>
    %292 = vector.shape_cast %291 : vector<64xf32> to vector<1x64xf32>
    %293 = vector.extract_strided_slice %80 {offsets = [15, 0], sizes = [1, 64], strides = [1, 1]} : vector<16x64xf32> to vector<1x64xf32>
    %294 = vector.extract_strided_slice %69 {offsets = [0, 15], sizes = [16, 1], strides = [1, 1]} : vector<16x16xf32> to vector<16x1xf32>
    %295 = vector.broadcast %293 : vector<1x64xf32> to vector<16x64xf32>
    %296 = vector.broadcast %294 : vector<16x1xf32> to vector<16x64xf32>
    %297 = arith.mulf %295, %296 : vector<16x64xf32>
    %c15 = arith.constant 15 : index
    %c0_78 = arith.constant 0 : index
    %c0_79 = arith.constant 0 : index
    %298 = vector.load %arg11[%c15, %c0_78, %c0_79] : memref<16x16x64xf32, #tpu.memory_space<vmem>>, vector<1x16x64xf32>
    %299 = vector.shape_cast %298 : vector<1x16x64xf32> to vector<16x64xf32>
    %300 = arith.mulf %299, %273 : vector<16x64xf32>
    %301 = arith.addf %300, %297 : vector<16x64xf32>
    %302 = vector.extract_strided_slice %71 {offsets = [0, 15], sizes = [16, 1], strides = [1, 1]} : vector<16x16xf32> to vector<16x1xf32>
    %303 = vector.broadcast %302 : vector<16x1xf32> to vector<16x64xf32>
    %304 = arith.mulf %301, %303 : vector<16x64xf32>
    %cst_80 = arith.constant dense<0.000000e+00> : vector<64xf32>
    %305 = vector.multi_reduction <add>, %304, %cst_80 [0] : vector<16x64xf32> to vector<64xf32>
    %306 = vector.shape_cast %305 : vector<64xf32> to vector<1x64xf32>
    %307 = tpu.concatenate %96, %110, %124, %138, %152, %166, %180, %194, %208, %222, %236, %250, %264, %278, %292, %306 in 0 : vector<1x64xf32>, vector<1x64xf32>, vector<1x64xf32>, vector<1x64xf32>, vector<1x64xf32>, vector<1x64xf32>, vector<1x64xf32>, vector<1x64xf32>, vector<1x64xf32>, vector<1x64xf32>, vector<1x64xf32>, vector<1x64xf32>, vector<1x64xf32>, vector<1x64xf32>, vector<1x64xf32>, vector<1x64xf32> -> vector<16x64xf32>
    %c0_81 = arith.constant 0 : index
    %c0_82 = arith.constant 0 : index
    %308 = vector.load %arg8[%c0_81, %c0_82] : memref<1x64xf32, #tpu.memory_space<vmem>>, vector<1x64xf32>
    %309 = vector.broadcast %308 : vector<1x64xf32> to vector<16x64xf32>
    %310 = arith.mulf %53, %309 : vector<16x64xf32>
    %311 = arith.addf %307, %310 : vector<16x64xf32>
    %cst_83 = arith.constant 5.000000e-01 : f32
    %312 = vector.broadcast %cst_83 : f32 to vector<16x64xf32>
    %313 = arith.mulf %312, %17 : vector<16x64xf32>
    %cst_84 = arith.constant 5.000000e-01 : f32
    %314 = vector.broadcast %cst_84 : f32 to vector<16x64xf32>
    %315 = arith.mulf %314, %17 : vector<16x64xf32>
    %316 = math.tanh %315 : vector<16x64xf32>
    %cst_85 = arith.constant 1.000000e+00 : f32
    %317 = vector.broadcast %cst_85 : f32 to vector<16x64xf32>
    %318 = arith.addf %317, %316 : vector<16x64xf32>
    %319 = arith.mulf %313, %318 : vector<16x64xf32>
    %320 = arith.mulf %311, %319 : vector<16x64xf32>
    %c0_86 = arith.constant 0 : index
    %c0_87 = arith.constant 0 : index
    %321 = vector.load %arg9[%c0_86, %c0_87] : memref<64x32xf32, #tpu.memory_space<vmem>>, vector<64x32xf32>
    %cst_88 = arith.constant dense<0.000000e+00> : vector<16x32xf32>
    %322 = tpu.matmul %320, %321, %cst_88 {dimension_numbers = #tpu.dot_dimension_numbers<[1], [0], [0], [1], [0, 0, 1, 1], [], []>} : vector<16x64xf32>, vector<64x32xf32>, vector<16x32xf32> -> vector<16x32xf32>
    %323 = arith.addf %322, %0 : vector<16x32xf32>
    %c0_89 = arith.constant 0 : index
    %c0_90 = arith.constant 0 : index
    %324 = vector.load %arg10[%c0_89, %c0_90] : memref<16x32xf32, #tpu.memory_space<vmem>>, vector<16x32xf32>
    tpu.vector_store %arg10[%c0_89, %c0_90], %323 {strides = array<i32>} : memref<16x32xf32, #tpu.memory_space<vmem>>, vector<16x32xf32>,
    return
  }
}

</mosaic_0001>

<llo_original>
// kernel: mamba_block.1
$region0: #{mamba_block.1}
  #allocation0 [shape = 'u32[]', space=smem, size = 0x4, offset = 0x4, fixed_abs, tag = 'smem constant byte address 0x4 - core index']
  #allocation1 [shape = 'u32[72,128]{1,0:T(1,128)}', space=vmem, size = 0x9000, scoped, tag = 'internal scratch']
  #allocation2 [shape = 'f32[16,16,64]{2,1,0:T(8,128)}', space=vmem, size = 0x20000, scoped, tag = 'scratch operand']
  %s0 = inlined_call_operand.vmem [shape: f32[16,32], index: 0, kind: input, shape index: {}]
  %s1 = inlined_call_operand.vmem [shape: f32[1,32], index: 1, kind: input, shape index: {}]
  %s2 = inlined_call_operand.vmem [shape: f32[32,128], index: 2, kind: input, shape index: {}]
  %s3 = inlined_call_operand.vmem [shape: f32[4,64], index: 3, kind: input, shape index: {}]
  %s4 = inlined_call_operand.vmem [shape: f32[1,64], index: 4, kind: input, shape index: {}]
  %s5 = inlined_call_operand.vmem [shape: f32[64,96], index: 5, kind: input, shape index: {}]
  %s6 = inlined_call_operand.vmem [shape: f32[1,64], index: 6, kind: input, shape index: {}]
  %s7 = inlined_call_operand.vmem [shape: f32[16,64], index: 7, kind: input, shape index: {}]
  %s8 = inlined_call_operand.vmem [shape: f32[1,64], index: 8, kind: input, shape index: {}]
  %s9 = inlined_call_operand.vmem [shape: f32[64,32], index: 9, kind: input, shape index: {}]
  %s10 = inlined_call_operand.vmem [shape: f32[16,32], index: 10, kind: output, shape index: {}]
  %s11 = sld [smem:[#allocation0]]
  $region50: #{mamba_block.1} parent=0
    _
  %s13 = ssub.s32 1, %s11
  %s14 = scalar_select 0, %s13, %s11
  // Predicated region
  $region2: #{mamba_block.1} parent=0 // pred_check
    _
  $region3: #{mamba_block.1} parent=0 // pred_check_branch
    %16 = sbr.rel (0) target = $region5
  $region4: #{mamba_block.1} parent=0 // pred_region
    _
  $region5: #{mamba_block.1} parent=0 // pred_fallthru
    _
  // Predicated region
  $region6: #{mamba_block.1} parent=0 // pred_check
    _
  $region7: #{mamba_block.1} parent=0 // pred_check_branch
    %18 = sbr.rel (0) target = $region9
  $region8: #{mamba_block.1} parent=0 // pred_region
    _
  $region9: #{mamba_block.1} parent=0 // pred_fallthru
    _
  // Predicated region
  $region10: #{mamba_block.1} parent=0 // pred_check
    _
  $region11: #{mamba_block.1} parent=0 // pred_check_branch
    %20 = sbr.rel (0) target = $region13
  $region12: #{mamba_block.1} parent=0 // pred_region
    _
  $region13: #{mamba_block.1} parent=0 // pred_fallthru
    _
  // Predicated region
  $region14: #{mamba_block.1} parent=0 // pred_check
    _
  $region15: #{mamba_block.1} parent=0 // pred_check_branch
    %22 = sbr.rel (0) target = $region17
  $region16: #{mamba_block.1} parent=0 // pred_region
    _
  $region17: #{mamba_block.1} parent=0 // pred_fallthru
    _
  // Predicated region
  $region18: #{mamba_block.1} parent=0 // pred_check
    _
  $region19: #{mamba_block.1} parent=0 // pred_check_branch
    %24 = sbr.rel (0) target = $region21
  $region20: #{mamba_block.1} parent=0 // pred_region
    _
  $region21: #{mamba_block.1} parent=0 // pred_fallthru
    _
  // Predicated region
  $region22: #{mamba_block.1} parent=0 // pred_check
    _
  $region23: #{mamba_block.1} parent=0 // pred_check_branch
    %26 = sbr.rel (0) target = $region25
  $region24: #{mamba_block.1} parent=0 // pred_region
    _
  $region25: #{mamba_block.1} parent=0 // pred_fallthru
    _
  // Predicated region
  $region26: #{mamba_block.1} parent=0 // pred_check
    _
  $region27: #{mamba_block.1} parent=0 // pred_check_branch
    %28 = sbr.rel (0) target = $region29
  $region28: #{mamba_block.1} parent=0 // pred_region
    _
  $region29: #{mamba_block.1} parent=0 // pred_fallthru
    _
  // Predicated region
  $region30: #{mamba_block.1} parent=0 // pred_check
    _
  $region31: #{mamba_block.1} parent=0 // pred_check_branch
    %30 = sbr.rel (0) target = $region33
  $region32: #{mamba_block.1} parent=0 // pred_region
    _
  $region33: #{mamba_block.1} parent=0 // pred_fallthru
    _
  // Predicated region
  $region34: #{mamba_block.1} parent=0 // pred_check
    _
  $region35: #{mamba_block.1} parent=0 // pred_check_branch
    %32 = sbr.rel (0) target = $region37
  $region36: #{mamba_block.1} parent=0 // pred_region
    _
  $region37: #{mamba_block.1} parent=0 // pred_fallthru
    _
  // Predicated region
  $region38: #{mamba_block.1} parent=0 // pred_check
    _
  $region39: #{mamba_block.1} parent=0 // pred_check_branch
    %34 = sbr.rel (0) target = $region41
  $region40: #{mamba_block.1} parent=0 // pred_region
    _
  $region41: #{mamba_block.1} parent=0 // pred_fallthru
    _
  %v35 = vld [vmem:[%s0] sm:$0xff]
  %v36 = vld [vmem:[%s0 + $0x8] sm:$0xff]
  %v37 = vmul.f32 %v35, %v35
  %v38 = vmul.f32 %v36, %v36
  %vm39 = vcmask 261120
  %v40 = vsel %vm39, %v37, 0.0
  %41 = vadd.xlane.f32.xlu0 %v40
  %v42 = vpop.xlane.xlu0 %41
  %v43 = vsel %vm39, %v38, 0.0
  %44 = vadd.xlane.f32.xlu0 %v43
  %v45 = vpop.xlane.xlu0 %44
  %v46 = vrcp.pop 32.0
  %v47 = vmul.f32 32.0, %v46
  %v48 = vsub.f32 1.0, %v47
  %v49 = vmul.f32 %v46, %v48
  %v50 = vadd.f32 %v46, %v49
  %vm51 = vweird.f32 %v46
  %v52 = vsel %vm51, %v46, %v50
  %v53 = vmul.f32 %v42, %v52
  %v54 = vmul.f32 %v45, %v52
  %v55 = vadd.f32 %v53, 1e-05
  %v56 = vadd.f32 %v54, 1e-05
  %v57 = vrsqrt.pop %v55
  %v58 = vmul.f32 %v57, %v55
  %v59 = vmul.f32 %v58, %v57
  %v60 = vmul.f32 0.5, %v59
  %v61 = vsub.f32 1.5, %v60
  %v62 = vmul.f32 %v57, %v61
  %vm63 = vweird.f32 %v55
  %vm64 = vweird.f32 %v57
  %vm65 = vmor %vm63, %vm64
  %v66 = vsel %vm65, %v57, %v62
  %v67 = vrsqrt.pop %v56
  %v68 = vmul.f32 %v67, %v56
  %v69 = vmul.f32 %v68, %v67
  %v70 = vmul.f32 0.5, %v69
  %v71 = vsub.f32 1.5, %v70
  %v72 = vmul.f32 %v67, %v71
  %vm73 = vweird.f32 %v56
  %vm74 = vweird.f32 %v67
  %vm75 = vmor %vm73, %vm74
  %v76 = vsel %vm75, %v67, %v72
  %v77 = vmul.f32 %v35, %v66
  %v78 = vmul.f32 %v36, %v76
  %v79 = vld [vmem:[%s1] sm:$0x1]
  %v81 = vperm.slane %v79, 0
  %v83 = vmul.f32 %v77, %v81
  %v84 = vmul.f32 %v78, %v81
  %v85 = vld [vmem:[%s2] sm:$0xff]
  %v86 = vld [vmem:[%s2 + $0x8] sm:$0xff]
  %v87 = vld [vmem:[%s2 + $0x10] sm:$0xff]
  %v88 = vld [vmem:[%s2 + $0x18] sm:$0xff]
  %v90 = vsel %vm39, %v83, 0
  %v93 = vsel %vm39, %v84, 0
  %95 = vmatpush.msra.mxu0 0.0
  %96 = vmatpush.msra.mxu0 0.0
  %97 = vmatpush.msra.mxu0 0.0
  %98 = vmatpush.msra.mxu0 0.0
  %99 = vmatpush.msra.mxu0 0.0
  %100 = vmatpush.msra.mxu0 0.0
  %101 = vmatpush.msra.mxu0 0.0
  %102 = vmatpush.msra.mxu0 0.0
  %103 = vmatpush.msra.mxu0 0.0
  %104 = vmatpush.msra.mxu0 0.0
  %105 = vmatpush.msra.mxu0 0.0
  %106 = vmatpush.msra.mxu0 0.0
  %107 = vmatpush.msra.mxu0 %v88
  %108 = vmatpush.msra.mxu0 %v87
  %109 = vmatpush.msra.mxu0 %v86
  %110 = vmatpush.msra.mxu0 %v85
  %111 = vmatmul.f32.gmra.mxu0 %v90
  %v112 = vpop.f32.mrf.mxu0
  %v113 = vadd.f32 0.0, %v112
  %114 = vmatmul.f32.gmra.mxu0 %v93
  %v115 = vpop.f32.mrf.mxu0
  %v116 = vadd.f32 0.0, %v115
  %117 = vdwg.mxu0
  %v118 = vld [vmem:[%s3] sm:$0xf]
  %v119 = vperm.slane %v118, 3
  %v120 = vmul.f32 %v113, %v119
  %v121 = vmul.f32 %v116, %v119
  %v122 = vld [vmem:[%s4] sm:$0x1]
  %v124 = vperm.slane %v122, 0
  %v126 = vadd.f32 %v120, %v124
  %v127 = vadd.f32 %v121, %v124
  %v128 = vperm.slane %v118, 0
  %v129 = vmul.f32 %v113, %v128
  %v130 = vmul.f32 %v116, %v128
  %vm133 = vcmask 1045504
  %v134 = vrot.slane %v129, 2
  %v135 = vrot.slane %v130, 2
  %v136 = vsel %vm133, %v134, %v135
  %v139 = vsel %vm133, 0.0, %v134
  %v140 = vadd.f32 %v126, %v139
  %v141 = vadd.f32 %v127, %v136
  %v142 = vperm.slane %v118, 1
  %v143 = vmul.f32 %v113, %v142
  %v144 = vmul.f32 %v116, %v142
  %vm147 = vcmask 1043456
  %v148 = vrot.slane %v143, 4
  %v149 = vrot.slane %v144, 4
  %v150 = vsel %vm147, %v148, %v149
  %v153 = vsel %vm147, 0.0, %v148
  %v154 = vadd.f32 %v140, %v153
  %v155 = vadd.f32 %v141, %v150
  %v156 = vperm.slane %v118, 2
  %v157 = vmul.f32 %v113, %v156
  %v158 = vmul.f32 %v116, %v156
  %vm161 = vcmask 1041408
  %v162 = vrot.slane %v157, 6
  %v163 = vrot.slane %v158, 6
  %v164 = vsel %vm161, %v162, %v163
  %v167 = vsel %vm161, 0.0, %v162
  %v168 = vadd.f32 %v154, %v167
  %v169 = vadd.f32 %v155, %v164
  %v170 = vmul.f32 %v168, 0.5
  %v171 = vmul.f32 %v169, 0.5
  %v172 = vtanh.pop %v170
  %v173 = vtanh.pop %v171
  %v174 = vadd.f32 %v172, 1.0
  %v175 = vadd.f32 %v173, 1.0
  %v176 = vmul.f32 %v170, %v174
  %v177 = vmul.f32 %v171, %v175
  %v178 = vld [vmem:[%s5] sm:$0xff]
  %v179 = vld [vmem:[%s5 + $0x8] sm:$0xff]
  %v180 = vld [vmem:[%s5 + $0x10] sm:$0xff]
  %v181 = vld [vmem:[%s5 + $0x18] sm:$0xff]
  %v182 = vld [vmem:[%s5 + $0x20] sm:$0xff]
  %v183 = vld [vmem:[%s5 + $0x28] sm:$0xff]
  %v184 = vld [vmem:[%s5 + $0x30] sm:$0xff]
  %v185 = vld [vmem:[%s5 + $0x38] sm:$0xff]
  %vm186 = vcmask 523264
  %v188 = vsel %vm186, %v176, 0
  %v191 = vsel %vm186, %v177, 0
  %193 = vmatpush.msra.mxu0 0.0
  %194 = vmatpush.msra.mxu0 0.0
  %195 = vmatpush.msra.mxu0 0.0
  %196 = vmatpush.msra.mxu0 0.0
  %197 = vmatpush.msra.mxu0 0.0
  %198 = vmatpush.msra.mxu0 0.0
  %199 = vmatpush.msra.mxu0 0.0
  %200 = vmatpush.msra.mxu0 0.0
  %201 = vmatpush.msra.mxu0 %v185
  %202 = vmatpush.msra.mxu0 %v184
  %203 = vmatpush.msra.mxu0 %v183
  %204 = vmatpush.msra.mxu0 %v182
  %205 = vmatpush.msra.mxu0 %v181
  %206 = vmatpush.msra.mxu0 %v180
  %207 = vmatpush.msra.mxu0 %v179
  %208 = vmatpush.msra.mxu0 %v178
  %209 = vmatmul.f32.gmra.mxu0 %v188
  %v210 = vpop.f32.mrf.mxu0
  %v211 = vadd.f32 0.0, %v210
  %212 = vmatmul.f32.gmra.mxu0 %v191
  %v213 = vpop.f32.mrf.mxu0
  %v214 = vadd.f32 0.0, %v213
  %215 = vdwg.mxu0
  %v216 = vld [vmem:[%s6] sm:$0x1]
  %v218 = vperm.slane %v216, 0
  %v220 = vadd.f32 %v211, %v218
  %v221 = vadd.f32 %v214, %v218
  %v222 = vmax.f32 %v220, 0.0
  %v223 = vmax.f32 %v221, 0.0
  %v224 = vand.u32 2147483647, %v220
  %v225 = vand.u32 2147483647, %v221
  %v226 = vsub.f32 0.0, %v224
  %v227 = vsub.f32 0.0, %v225
  %v228 = vmul.f32 %v226, 1.442695
  %v229 = vpow.pop %v228
  %v230 = vmul.f32 %v227, 1.442695
  %v231 = vpow.pop %v230
  %v232 = vadd.f32 %v229, 1.0
  %v233 = vlog2.pop %v232
  %v234 = vmul.f32 %v233, 0.6931472
  %v235 = vmul.f32 -0.5, %v229
  %v236 = vadd.f32 %v235, 1.0
  %v237 = vmul.f32 %v236, %v229
  %v238 = vand.u32 2147483647, %v229
  %vm239 = vcmp.lt.f32.partialorder %v238, 0.0004427343
  %v240 = vsel %vm239, %v237, %v234
  %v241 = vadd.f32 %v231, 1.0
  %v242 = vlog2.pop %v241
  %v243 = vmul.f32 %v242, 0.6931472
  %v244 = vmul.f32 -0.5, %v231
  %v245 = vadd.f32 %v244, 1.0
  %v246 = vmul.f32 %v245, %v231
  %v247 = vand.u32 2147483647, %v231
  %vm248 = vcmp.lt.f32.partialorder %v247, 0.0004427343
  %v249 = vsel %vm248, %v246, %v243
  %v250 = vadd.f32 %v222, %v240
  %v251 = vadd.f32 %v223, %v249
  %254 = vrot.lane.b32.xlu0 %v211, 64
  %v255 = vpop.permute.xlu0 %254
  %256 = vrot.lane.b32.xlu0 %v214, 64
  %v257 = vpop.permute.xlu0 %256
  %260 = vxpose.xlu0.b32.start [1/16] %v255, 128
  %261 = vxpose.xlu0.b32.cont [2/16] %v257, 128
  %262 = vxpose.xlu0.b32.cont [3/16] 0.0, 128
  %263 = vxpose.xlu0.b32.cont [4/16] 0.0, 128
  %264 = vxpose.xlu0.b32.cont [5/16] 0.0, 128
  %265 = vxpose.xlu0.b32.cont [6/16] 0.0, 128
  %266 = vxpose.xlu0.b32.cont [7/16] 0.0, 128
  %267 = vxpose.xlu0.b32.cont [8/16] 0.0, 128
  %268 = vxpose.xlu0.b32.cont [9/16] 0.0, 128
  %269 = vxpose.xlu0.b32.cont [10/16] 0.0, 128
  %270 = vxpose.xlu0.b32.cont [11/16] 0.0, 128
  %271 = vxpose.xlu0.b32.cont [12/16] 0.0, 128
  %272 = vxpose.xlu0.b32.cont [13/16] 0.0, 128
  %273 = vxpose.xlu0.b32.cont [14/16] 0.0, 128
  %274 = vxpose.xlu0.b32.cont [15/16] 0.0, 128
  %275 = vxpose.xlu0.b32.end [16/16] 0.0, 128
  %v276 = vpop.trf.xlu0
  %v277 = vpop.trf.xlu0
  %v278 = vpop.trf.xlu0
  %v279 = vpop.trf.xlu0
  %v280 = vpop.trf.xlu0
  %v281 = vpop.trf.xlu0
  %v282 = vpop.trf.xlu0
  %v283 = vpop.trf.xlu0
  %v284 = vpop.trf.xlu0
  %v285 = vpop.trf.xlu0
  %v286 = vpop.trf.xlu0
  %v287 = vpop.trf.xlu0
  %v288 = vpop.trf.xlu0
  %v289 = vpop.trf.xlu0
  %v290 = vpop.trf.xlu0
  %v291 = vpop.trf.xlu0
  %292 = vrot.lane.b32.xlu0 %v211, 48
  %v293 = vpop.permute.xlu0 %292
  %294 = vrot.lane.b32.xlu0 %v214, 48
  %v295 = vpop.permute.xlu0 %294
  %298 = vxpose.xlu0.b32.start [1/16] %v293, 128
  %299 = vxpose.xlu0.b32.cont [2/16] %v295, 128
  %300 = vxpose.xlu0.b32.cont [3/16] 0.0, 128
  %301 = vxpose.xlu0.b32.cont [4/16] 0.0, 128
  %302 = vxpose.xlu0.b32.cont [5/16] 0.0, 128
  %303 = vxpose.xlu0.b32.cont [6/16] 0.0, 128
  %304 = vxpose.xlu0.b32.cont [7/16] 0.0, 128
  %305 = vxpose.xlu0.b32.cont [8/16] 0.0, 128
  %306 = vxpose.xlu0.b32.cont [9/16] 0.0, 128
  %307 = vxpose.xlu0.b32.cont [10/16] 0.0, 128
  %308 = vxpose.xlu0.b32.cont [11/16] 0.0, 128
  %309 = vxpose.xlu0.b32.cont [12/16] 0.0, 128
  %310 = vxpose.xlu0.b32.cont [13/16] 0.0, 128
  %311 = vxpose.xlu0.b32.cont [14/16] 0.0, 128
  %312 = vxpose.xlu0.b32.cont [15/16] 0.0, 128
  %313 = vxpose.xlu0.b32.end [16/16] 0.0, 128
  %v314 = vpop.trf.xlu0
  %v315 = vpop.trf.xlu0
  %v316 = vpop.trf.xlu0
  %v317 = vpop.trf.xlu0
  %v318 = vpop.trf.xlu0
  %v319 = vpop.trf.xlu0
  %v320 = vpop.trf.xlu0
  %v321 = vpop.trf.xlu0
  %v322 = vpop.trf.xlu0
  %v323 = vpop.trf.xlu0
  %v324 = vpop.trf.xlu0
  %v325 = vpop.trf.xlu0
  %v326 = vpop.trf.xlu0
  %v327 = vpop.trf.xlu0
  %v328 = vpop.trf.xlu0
  %v329 = vpop.trf.xlu0
  %v330 = vld [vmem:[%s7] sm:$0xff]
  %v331 = vld [vmem:[%s7 + $0x8] sm:$0xff]
  %v334 = vrot.slane %v250, 1
  %v335 = vrot.slane %v250, 2
  %v336 = vrot.slane %v250, 3
  %v337 = vrot.slane %v250, 4
  %v338 = vrot.slane %v250, 5
  %v339 = vrot.slane %v250, 6
  %v340 = vrot.slane %v250, 7
  %v341 = vrot.slane %v251, 1
  %v342 = vrot.slane %v251, 2
  %v343 = vrot.slane %v251, 3
  %v344 = vrot.slane %v251, 4
  %v345 = vrot.slane %v251, 5
  %v346 = vrot.slane %v251, 6
  %v347 = vrot.slane %v251, 7
  %v348 = vperm.slane %v250, 0
  %v349 = vperm.slane %v334, 0
  %v350 = vperm.slane %v335, 0
  %v351 = vperm.slane %v336, 0
  %v352 = vperm.slane %v337, 0
  %v353 = vperm.slane %v338, 0
  %v354 = vperm.slane %v339, 0
  %v355 = vperm.slane %v340, 0
  %v356 = vperm.slane %v251, 0
  %v357 = vperm.slane %v341, 0
  %v358 = vperm.slane %v342, 0
  %v359 = vperm.slane %v343, 0
  %v360 = vperm.slane %v344, 0
  %v361 = vperm.slane %v345, 0
  %v362 = vperm.slane %v346, 0
  %v363 = vperm.slane %v347, 0
  %v380 = vmul.f32 %v348, %v330
  %v381 = vmul.f32 %v348, %v331
  %v382 = vmul.f32 %v349, %v330
  %v383 = vmul.f32 %v349, %v331
  %v384 = vmul.f32 %v350, %v330
  %v385 = vmul.f32 %v350, %v331
  %v386 = vmul.f32 %v351, %v330
  %v387 = vmul.f32 %v351, %v331
  %v388 = vmul.f32 %v352, %v330
  %v389 = vmul.f32 %v352, %v331
  %v390 = vmul.f32 %v353, %v330
  %v391 = vmul.f32 %v353, %v331
  %v392 = vmul.f32 %v354, %v330
  %v393 = vmul.f32 %v354, %v331
  %v394 = vmul.f32 %v355, %v330
  %v395 = vmul.f32 %v355, %v331
  %v396 = vmul.f32 %v356, %v330
  %v397 = vmul.f32 %v356, %v331
  %v398 = vmul.f32 %v357, %v330
  %v399 = vmul.f32 %v357, %v331
  %v400 = vmul.f32 %v358, %v330
  %v401 = vmul.f32 %v358, %v331
  %v402 = vmul.f32 %v359, %v330
  %v403 = vmul.f32 %v359, %v331
  %v404 = vmul.f32 %v360, %v330
  %v405 = vmul.f32 %v360, %v331
  %v406 = vmul.f32 %v361, %v330
  %v407 = vmul.f32 %v361, %v331
  %v408 = vmul.f32 %v362, %v330
  %v409 = vmul.f32 %v362, %v331
  %v410 = vmul.f32 %v363, %v330
  %v411 = vmul.f32 %v363, %v331
  %v412 = vmul.f32 %v380, 1.442695
  %v413 = vpow.pop %v412
  %v414 = vmul.f32 %v381, 1.442695
  %v415 = vpow.pop %v414
  %v416 = vmul.f32 %v382, 1.442695
  %v417 = vpow.pop %v416
  %v418 = vmul.f32 %v383, 1.442695
  %v419 = vpow.pop %v418
  %v420 = vmul.f32 %v384, 1.442695
  %v421 = vpow.pop %v420
  %v422 = vmul.f32 %v385, 1.442695
  %v423 = vpow.pop %v422
  %v424 = vmul.f32 %v386, 1.442695
  %v425 = vpow.pop %v424
  %v426 = vmul.f32 %v387, 1.442695
  %v427 = vpow.pop %v426
  %v428 = vmul.f32 %v388, 1.442695
  %v429 = vpow.pop %v428
  %v430 = vmul.f32 %v389, 1.442695
  %v431 = vpow.pop %v430
  %v432 = vmul.f32 %v390, 1.442695
  %v433 = vpow.pop %v432
  %v434 = vmul.f32 %v391, 1.442695
  %v435 = vpow.pop %v434
  %v436 = vmul.f32 %v392, 1.442695
  %v437 = vpow.pop %v436
  %v438 = vmul.f32 %v393, 1.442695
  %v439 = vpow.pop %v438
  %v440 = vmul.f32 %v394, 1.442695
  %v441 = vpow.pop %v440
  %v442 = vmul.f32 %v395, 1.442695
  %v443 = vpow.pop %v442
  %v444 = vmul.f32 %v396, 1.442695
  %v445 = vpow.pop %v444
  %v446 = vmul.f32 %v397, 1.442695
  %v447 = vpow.pop %v446
  %v448 = vmul.f32 %v398, 1.442695
  %v449 = vpow.pop %v448
  %v450 = vmul.f32 %v399, 1.442695
  %v451 = vpow.pop %v450
  %v452 = vmul.f32 %v400, 1.442695
  %v453 = vpow.pop %v452
  %v454 = vmul.f32 %v401, 1.442695
  %v455 = vpow.pop %v454
  %v456 = vmul.f32 %v402, 1.442695
  %v457 = vpow.pop %v456
  %v458 = vmul.f32 %v403, 1.442695
  %v459 = vpow.pop %v458
  %v460 = vmul.f32 %v404, 1.442695
  %v461 = vpow.pop %v460
  %v462 = vmul.f32 %v405, 1.442695
  %v463 = vpow.pop %v462
  %v464 = vmul.f32 %v406, 1.442695
  %v465 = vpow.pop %v464
  %v466 = vmul.f32 %v407, 1.442695
  %v467 = vpow.pop %v466
  %v468 = vmul.f32 %v408, 1.442695
  %v469 = vpow.pop %v468
  %v470 = vmul.f32 %v409, 1.442695
  %v471 = vpow.pop %v470
  %v472 = vmul.f32 %v410, 1.442695
  %v473 = vpow.pop %v472
  %v474 = vmul.f32 %v411, 1.442695
  %v475 = vpow.pop %v474
  %476 = vst.msk [vmem:[#allocation2] sm:$0xff] %vm186, %v413
  %477 = vst.msk [vmem:[#allocation2 + $0x8] sm:$0xff] %vm186, %v415
  %478 = vst.msk [vmem:[#allocation2 + $0x10] sm:$0xff] %vm186, %v417
  %479 = vst.msk [vmem:[#allocation2 + $0x18] sm:$0xff] %vm186, %v419
  %480 = vst.msk [vmem:[#allocation2 + $0x20] sm:$0xff] %vm186, %v421
  %481 = vst.msk [vmem:[#allocation2 + $0x28] sm:$0xff] %vm186, %v423
  %482 = vst.msk [vmem:[#allocation2 + $0x30] sm:$0xff] %vm186, %v425
  %483 = vst.msk [vmem:[#allocation2 + $0x38] sm:$0xff] %vm186, %v427
  %484 = vst.msk [vmem:[#allocation2 + $0x40] sm:$0xff] %vm186, %v429
  %485 = vst.msk [vmem:[#allocation2 + $0x48] sm:$0xff] %vm186, %v431
  %486 = vst.msk [vmem:[#allocation2 + $0x50] sm:$0xff] %vm186, %v433
  %487 = vst.msk [vmem:[#allocation2 + $0x58] sm:$0xff] %vm186, %v435
  %488 = vst.msk [vmem:[#allocation2 + $0x60] sm:$0xff] %vm186, %v437
  %489 = vst.msk [vmem:[#allocation2 + $0x68] sm:$0xff] %vm186, %v439
  %490 = vst.msk [vmem:[#allocation2 + $0x70] sm:$0xff] %vm186, %v441
  %491 = vst.msk [vmem:[#allocation2 + $0x78] sm:$0xff] %vm186, %v443
  %492 = vst.msk [vmem:[#allocation2 + $0x80] sm:$0xff] %vm186, %v445
  %493 = vst.msk [vmem:[#allocation2 + $0x88] sm:$0xff] %vm186, %v447
  %494 = vst.msk [vmem:[#allocation2 + $0x90] sm:$0xff] %vm186, %v449
  %495 = vst.msk [vmem:[#allocation2 + $0x98] sm:$0xff] %vm186, %v451
  %496 = vst.msk [vmem:[#allocation2 + $0xa0] sm:$0xff] %vm186, %v453
  %497 = vst.msk [vmem:[#allocation2 + $0xa8] sm:$0xff] %vm186, %v455
  %498 = vst.msk [vmem:[#allocation2 + $0xb0] sm:$0xff] %vm186, %v457
  %499 = vst.msk [vmem:[#allocation2 + $0xb8] sm:$0xff] %vm186, %v459
  %500 = vst.msk [vmem:[#allocation2 + $0xc0] sm:$0xff] %vm186, %v461
  %501 = vst.msk [vmem:[#allocation2 + $0xc8] sm:$0xff] %vm186, %v463
  %502 = vst.msk [vmem:[#allocation2 + $0xd0] sm:$0xff] %vm186, %v465
  %503 = vst.msk [vmem:[#allocation2 + $0xd8] sm:$0xff] %vm186, %v467
  %504 = vst.msk [vmem:[#allocation2 + $0xe0] sm:$0xff] %vm186, %v469
  %505 = vst.msk [vmem:[#allocation2 + $0xe8] sm:$0xff] %vm186, %v471
  %506 = vst.msk [vmem:[#allocation2 + $0xf0] sm:$0xff] %vm186, %v473
  %507 = vst.msk [vmem:[#allocation2 + $0xf8] sm:$0xff] %vm186, %v475
  %v508 = vmul.f32 %v250, %v176
  %v509 = vmul.f32 %v251, %v177
  %v510 = vperm.slane %v508, 0
  %512 = vset.pattern.permute.xlu0 0
  %513 = vperm.xlu0 %512, %v276
  %v514 = vpop.permute.xlu0 %513
  %517 = vset.pattern.permute.xlu0 0
  %518 = vperm.xlu0 %517, %v277
  %v519 = vpop.permute.xlu0 %518
  %v521 = vmul.f32 %v510, %v514
  %v522 = vmul.f32 %v510, %v519
  %v523 = vld [vmem:[#allocation2] sm:$0xff]
  %v524 = vld [vmem:[#allocation2 + $0x8] sm:$0xff]
  %v525 = vmul.f32 %v523, 0.0
  %v526 = vmul.f32 %v524, 0.0
  %v527 = vadd.f32 %v525, %v521
  %v528 = vadd.f32 %v526, %v522
  %530 = vset.pattern.permute.xlu0 0
  %531 = vperm.xlu0 %530, %v314
  %v532 = vpop.permute.xlu0 %531
  %535 = vset.pattern.permute.xlu0 0
  %536 = vperm.xlu0 %535, %v315
  %v537 = vpop.permute.xlu0 %536
  %v539 = vmul.f32 %v527, %v532
  %v540 = vmul.f32 %v528, %v537
  %v541 = vsel %vm186, %v539, 0.0
  %v542 = vsel %vm186, %v540, 0.0
  %v543 = vadd.f32 %v541, %v542
  %v544 = vrot.slane %v543, 4
  %v545 = vadd.f32 %v543, %v544
  %v546 = vrot.slane %v545, 2
  %v547 = vadd.f32 %v545, %v546
  %v548 = vrot.slane %v547, 1
  %v549 = vadd.f32 %v547, %v548
  %v550 = vperm.slane %v508, 1
  %551 = vset.pattern.permute.xlu0 1
  %552 = vperm.xlu0 %551, %v276
  %v553 = vpop.permute.xlu0 %552
  %555 = vset.pattern.permute.xlu0 1
  %556 = vperm.xlu0 %555, %v277
  %v557 = vpop.permute.xlu0 %556
  %v559 = vmul.f32 %v550, %v553
  %v560 = vmul.f32 %v550, %v557
  %s561 = scalar_lea.vmem [#allocation2], 16
  %v562 = vld [vmem:[%s561] sm:$0xff]
  %v563 = vld [vmem:[%s561 + $0x8] sm:$0xff]
  %v564 = vmul.f32 %v562, 0.0
  %v565 = vmul.f32 %v563, 0.0
  %v566 = vadd.f32 %v564, %v559
  %v567 = vadd.f32 %v565, %v560
  %568 = vset.pattern.permute.xlu0 1
  %569 = vperm.xlu0 %568, %v314
  %v570 = vpop.permute.xlu0 %569
  %572 = vset.pattern.permute.xlu0 1
  %573 = vperm.xlu0 %572, %v315
  %v574 = vpop.permute.xlu0 %573
  %v576 = vmul.f32 %v566, %v570
  %v577 = vmul.f32 %v567, %v574
  %v578 = vsel %vm186, %v576, 0.0
  %v579 = vsel %vm186, %v577, 0.0
  %v580 = vadd.f32 %v578, %v579
  %v581 = vrot.slane %v580, 4
  %v582 = vadd.f32 %v580, %v581
  %v583 = vrot.slane %v582, 2
  %v584 = vadd.f32 %v582, %v583
  %v585 = vrot.slane %v584, 1
  %v586 = vadd.f32 %v584, %v585
  %v587 = vperm.slane %v508, 2
  %588 = vset.pattern.permute.xlu0 2
  %589 = vperm.xlu0 %588, %v276
  %v590 = vpop.permute.xlu0 %589
  %592 = vset.pattern.permute.xlu0 2
  %593 = vperm.xlu0 %592, %v277
  %v594 = vpop.permute.xlu0 %593
  %v596 = vmul.f32 %v587, %v590
  %v597 = vmul.f32 %v587, %v594
  %s598 = scalar_lea.vmem [#allocation2], 32
  %v599 = vld [vmem:[%s598] sm:$0xff]
  %v600 = vld [vmem:[%s598 + $0x8] sm:$0xff]
  %v601 = vmul.f32 %v599, %v527
  %v602 = vmul.f32 %v600, %v528
  %v603 = vadd.f32 %v601, %v596
  %v604 = vadd.f32 %v602, %v597
  %605 = vset.pattern.permute.xlu0 2
  %606 = vperm.xlu0 %605, %v314
  %v607 = vpop.permute.xlu0 %606
  %609 = vset.pattern.permute.xlu0 2
  %610 = vperm.xlu0 %609, %v315
  %v611 = vpop.permute.xlu0 %610
  %v613 = vmul.f32 %v603, %v607
  %v614 = vmul.f32 %v604, %v611
  %v615 = vsel %vm186, %v613, 0.0
  %v616 = vsel %vm186, %v614, 0.0
  %v617 = vadd.f32 %v615, %v616
  %v618 = vrot.slane %v617, 4
  %v619 = vadd.f32 %v617, %v618
  %v620 = vrot.slane %v619, 2
  %v621 = vadd.f32 %v619, %v620
  %v622 = vrot.slane %v621, 1
  %v623 = vadd.f32 %v621, %v622
  %v624 = vperm.slane %v508, 3
  %625 = vset.pattern.permute.xlu0 3
  %626 = vperm.xlu0 %625, %v276
  %v627 = vpop.permute.xlu0 %626
  %629 = vset.pattern.permute.xlu0 3
  %630 = vperm.xlu0 %629, %v277
  %v631 = vpop.permute.xlu0 %630
  %v633 = vmul.f32 %v624, %v627
  %v634 = vmul.f32 %v624, %v631
  %s635 = scalar_lea.vmem [#allocation2], 48
  %v636 = vld [vmem:[%s635] sm:$0xff]
  %v637 = vld [vmem:[%s635 + $0x8] sm:$0xff]
  %v638 = vmul.f32 %v636, %v566
  %v639 = vmul.f32 %v637, %v567
  %v640 = vadd.f32 %v638, %v633
  %v641 = vadd.f32 %v639, %v634
  %642 = vset.pattern.permute.xlu0 3
  %643 = vperm.xlu0 %642, %v314
  %v644 = vpop.permute.xlu0 %643
  %646 = vset.pattern.permute.xlu0 3
  %647 = vperm.xlu0 %646, %v315
  %v648 = vpop.permute.xlu0 %647
  %v650 = vmul.f32 %v640, %v644
  %v651 = vmul.f32 %v641, %v648
  %v652 = vsel %vm186, %v650, 0.0
  %v653 = vsel %vm186, %v651, 0.0
  %v654 = vadd.f32 %v652, %v653
  %v655 = vrot.slane %v654, 4
  %v656 = vadd.f32 %v654, %v655
  %v657 = vrot.slane %v656, 2
  %v658 = vadd.f32 %v656, %v657
  %v659 = vrot.slane %v658, 1
  %v660 = vadd.f32 %v658, %v659
  %v661 = vperm.slane %v508, 4
  %662 = vset.pattern.permute.xlu0 4
  %663 = vperm.xlu0 %662, %v276
  %v664 = vpop.permute.xlu0 %663
  %666 = vset.pattern.permute.xlu0 4
  %667 = vperm.xlu0 %666, %v277
  %v668 = vpop.permute.xlu0 %667
  %v670 = vmul.f32 %v661, %v664
  %v671 = vmul.f32 %v661, %v668
  %s672 = scalar_lea.vmem [#allocation2], 64
  %v673 = vld [vmem:[%s672] sm:$0xff]
  %v674 = vld [vmem:[%s672 + $0x8] sm:$0xff]
  %v675 = vmul.f32 %v673, %v603
  %v676 = vmul.f32 %v674, %v604
  %v677 = vadd.f32 %v675, %v670
  %v678 = vadd.f32 %v676, %v671
  %679 = vset.pattern.permute.xlu0 4
  %680 = vperm.xlu0 %679, %v314
  %v681 = vpop.permute.xlu0 %680
  %683 = vset.pattern.permute.xlu0 4
  %684 = vperm.xlu0 %683, %v315
  %v685 = vpop.permute.xlu0 %684
  %v687 = vmul.f32 %v677, %v681
  %v688 = vmul.f32 %v678, %v685
  %v689 = vsel %vm186, %v687, 0.0
  %v690 = vsel %vm186, %v688, 0.0
  %v691 = vadd.f32 %v689, %v690
  %v692 = vrot.slane %v691, 4
  %v693 = vadd.f32 %v691, %v692
  %v694 = vrot.slane %v693, 2
  %v695 = vadd.f32 %v693, %v694
  %v696 = vrot.slane %v695, 1
  %v697 = vadd.f32 %v695, %v696
  %v698 = vperm.slane %v508, 5
  %699 = vset.pattern.permute.xlu0 5
  %700 = vperm.xlu0 %699, %v276
  %v701 = vpop.permute.xlu0 %700
  %703 = vset.pattern.permute.xlu0 5
  %704 = vperm.xlu0 %703, %v277
  %v705 = vpop.permute.xlu0 %704
  %v707 = vmul.f32 %v698, %v701
  %v708 = vmul.f32 %v698, %v705
  %s709 = scalar_lea.vmem [#allocation2], 80
  %v710 = vld [vmem:[%s709] sm:$0xff]
  %v711 = vld [vmem:[%s709 + $0x8] sm:$0xff]
  %v712 = vmul.f32 %v710, %v640
  %v713 = vmul.f32 %v711, %v641
  %v714 = vadd.f32 %v712, %v707
  %v715 = vadd.f32 %v713, %v708
  %716 = vset.pattern.permute.xlu0 5
  %717 = vperm.xlu0 %716, %v314
  %v718 = vpop.permute.xlu0 %717
  %720 = vset.pattern.permute.xlu0 5
  %721 = vperm.xlu0 %720, %v315
  %v722 = vpop.permute.xlu0 %721
  %v724 = vmul.f32 %v714, %v718
  %v725 = vmul.f32 %v715, %v722
  %v726 = vsel %vm186, %v724, 0.0
  %v727 = vsel %vm186, %v725, 0.0
  %v728 = vadd.f32 %v726, %v727
  %v729 = vrot.slane %v728, 4
  %v730 = vadd.f32 %v728, %v729
  %v731 = vrot.slane %v730, 2
  %v732 = vadd.f32 %v730, %v731
  %v733 = vrot.slane %v732, 1
  %v734 = vadd.f32 %v732, %v733
  %v735 = vperm.slane %v508, 6
  %736 = vset.pattern.permute.xlu0 6
  %737 = vperm.xlu0 %736, %v276
  %v738 = vpop.permute.xlu0 %737
  %740 = vset.pattern.permute.xlu0 6
  %741 = vperm.xlu0 %740, %v277
  %v742 = vpop.permute.xlu0 %741
  %v744 = vmul.f32 %v735, %v738
  %v745 = vmul.f32 %v735, %v742
  %s746 = scalar_lea.vmem [#allocation2], 96
  %v747 = vld [vmem:[%s746] sm:$0xff]
  %v748 = vld [vmem:[%s746 + $0x8] sm:$0xff]
  %v749 = vmul.f32 %v747, %v677
  %v750 = vmul.f32 %v748, %v678
  %v751 = vadd.f32 %v749, %v744
  %v752 = vadd.f32 %v750, %v745
  %753 = vset.pattern.permute.xlu0 6
  %754 = vperm.xlu0 %753, %v314
  %v755 = vpop.permute.xlu0 %754
  %757 = vset.pattern.permute.xlu0 6
  %758 = vperm.xlu0 %757, %v315
  %v759 = vpop.permute.xlu0 %758
  %v761 = vmul.f32 %v751, %v755
  %v762 = vmul.f32 %v752, %v759
  %v763 = vsel %vm186, %v761, 0.0
  %v764 = vsel %vm186, %v762, 0.0
  %v765 = vadd.f32 %v763, %v764
  %v766 = vrot.slane %v765, 4
  %v767 = vadd.f32 %v765, %v766
  %v768 = vrot.slane %v767, 2
  %v769 = vadd.f32 %v767, %v768
  %v770 = vrot.slane %v769, 1
  %v771 = vadd.f32 %v769, %v770
  %v772 = vperm.slane %v508, 7
  %773 = vset.pattern.permute.xlu0 7
  %774 = vperm.xlu0 %773, %v276
  %v775 = vpop.permute.xlu0 %774
  %777 = vset.pattern.permute.xlu0 7
  %778 = vperm.xlu0 %777, %v277
  %v779 = vpop.permute.xlu0 %778
  %v781 = vmul.f32 %v772, %v775
  %v782 = vmul.f32 %v772, %v779
  %s783 = scalar_lea.vmem [#allocation2], 112
  %v784 = vld [vmem:[%s783] sm:$0xff]
  %v785 = vld [vmem:[%s783 + $0x8] sm:$0xff]
  %v786 = vmul.f32 %v784, %v714
  %v787 = vmul.f32 %v785, %v715
  %v788 = vadd.f32 %v786, %v781
  %v789 = vadd.f32 %v787, %v782
  %790 = vset.pattern.permute.xlu0 7
  %791 = vperm.xlu0 %790, %v314
  %v792 = vpop.permute.xlu0 %791
  %794 = vset.pattern.permute.xlu0 7
  %795 = vperm.xlu0 %794, %v315
  %v796 = vpop.permute.xlu0 %795
  %v798 = vmul.f32 %v788, %v792
  %v799 = vmul.f32 %v789, %v796
  %v800 = vsel %vm186, %v798, 0.0
  %v801 = vsel %vm186, %v799, 0.0
  %v802 = vadd.f32 %v800, %v801
  %v803 = vrot.slane %v802, 4
  %v804 = vadd.f32 %v802, %v803
  %v805 = vrot.slane %v804, 2
  %v806 = vadd.f32 %v804, %v805
  %v807 = vrot.slane %v806, 1
  %v808 = vadd.f32 %v806, %v807
  %v809 = vperm.slane %v509, 0
  %810 = vset.pattern.permute.xlu0 8
  %811 = vperm.xlu0 %810, %v276
  %v812 = vpop.permute.xlu0 %811
  %814 = vset.pattern.permute.xlu0 8
  %815 = vperm.xlu0 %814, %v277
  %v816 = vpop.permute.xlu0 %815
  %v818 = vmul.f32 %v809, %v812
  %v819 = vmul.f32 %v809, %v816
  %s820 = scalar_lea.vmem [#allocation2], 128
  %v821 = vld [vmem:[%s820] sm:$0xff]
  %v822 = vld [vmem:[%s820 + $0x8] sm:$0xff]
  %v823 = vmul.f32 %v821, %v751
  %v824 = vmul.f32 %v822, %v752
  %v825 = vadd.f32 %v823, %v818
  %v826 = vadd.f32 %v824, %v819
  %827 = vset.pattern.permute.xlu0 8
  %828 = vperm.xlu0 %827, %v314
  %v829 = vpop.permute.xlu0 %828
  %831 = vset.pattern.permute.xlu0 8
  %832 = vperm.xlu0 %831, %v315
  %v833 = vpop.permute.xlu0 %832
  %v835 = vmul.f32 %v825, %v829
  %v836 = vmul.f32 %v826, %v833
  %v837 = vsel %vm186, %v835, 0.0
  %v838 = vsel %vm186, %v836, 0.0
  %v839 = vadd.f32 %v837, %v838
  %v840 = vrot.slane %v839, 4
  %v841 = vadd.f32 %v839, %v840
  %v842 = vrot.slane %v841, 2
  %v843 = vadd.f32 %v841, %v842
  %v844 = vrot.slane %v843, 1
  %v845 = vadd.f32 %v843, %v844
  %v846 = vperm.slane %v509, 1
  %847 = vset.pattern.permute.xlu0 9
  %848 = vperm.xlu0 %847, %v276
  %v849 = vpop.permute.xlu0 %848
  %851 = vset.pattern.permute.xlu0 9
  %852 = vperm.xlu0 %851, %v277
  %v853 = vpop.permute.xlu0 %852
  %v855 = vmul.f32 %v846, %v849
  %v856 = vmul.f32 %v846, %v853
  %s857 = scalar_lea.vmem [#allocation2], 144
  %v858 = vld [vmem:[%s857] sm:$0xff]
  %v859 = vld [vmem:[%s857 + $0x8] sm:$0xff]
  %v860 = vmul.f32 %v858, %v788
  %v861 = vmul.f32 %v859, %v789
  %v862 = vadd.f32 %v860, %v855
  %v863 = vadd.f32 %v861, %v856
  %864 = vset.pattern.permute.xlu0 9
  %865 = vperm.xlu0 %864, %v314
  %v866 = vpop.permute.xlu0 %865
  %868 = vset.pattern.permute.xlu0 9
  %869 = vperm.xlu0 %868, %v315
  %v870 = vpop.permute.xlu0 %869
  %v872 = vmul.f32 %v862, %v866
  %v873 = vmul.f32 %v863, %v870
  %v874 = vsel %vm186, %v872, 0.0
  %v875 = vsel %vm186, %v873, 0.0
  %v876 = vadd.f32 %v874, %v875
  %v877 = vrot.slane %v876, 4
  %v878 = vadd.f32 %v876, %v877
  %v879 = vrot.slane %v878, 2
  %v880 = vadd.f32 %v878, %v879
  %v881 = vrot.slane %v880, 1
  %v882 = vadd.f32 %v880, %v881
  %v883 = vperm.slane %v509, 2
  %884 = vset.pattern.permute.xlu0 10
  %885 = vperm.xlu0 %884, %v276
  %v886 = vpop.permute.xlu0 %885
  %888 = vset.pattern.permute.xlu0 10
  %889 = vperm.xlu0 %888, %v277
  %v890 = vpop.permute.xlu0 %889
  %v892 = vmul.f32 %v883, %v886
  %v893 = vmul.f32 %v883, %v890
  %s894 = scalar_lea.vmem [#allocation2], 160
  %v895 = vld [vmem:[%s894] sm:$0xff]
  %v896 = vld [vmem:[%s894 + $0x8] sm:$0xff]
  %v897 = vmul.f32 %v895, %v825
  %v898 = vmul.f32 %v896, %v826
  %v899 = vadd.f32 %v897, %v892
  %v900 = vadd.f32 %v898, %v893
  %901 = vset.pattern.permute.xlu0 10
  %902 = vperm.xlu0 %901, %v314
  %v903 = vpop.permute.xlu0 %902
  %905 = vset.pattern.permute.xlu0 10
  %906 = vperm.xlu0 %905, %v315
  %v907 = vpop.permute.xlu0 %906
  %v909 = vmul.f32 %v899, %v903
  %v910 = vmul.f32 %v900, %v907
  %v911 = vsel %vm186, %v909, 0.0
  %v912 = vsel %vm186, %v910, 0.0
  %v913 = vadd.f32 %v911, %v912
  %v914 = vrot.slane %v913, 4
  %v915 = vadd.f32 %v913, %v914
  %v916 = vrot.slane %v915, 2
  %v917 = vadd.f32 %v915, %v916
  %v918 = vrot.slane %v917, 1
  %v919 = vadd.f32 %v917, %v918
  %v920 = vperm.slane %v509, 3
  %921 = vset.pattern.permute.xlu0 11
  %922 = vperm.xlu0 %921, %v276
  %v923 = vpop.permute.xlu0 %922
  %925 = vset.pattern.permute.xlu0 11
  %926 = vperm.xlu0 %925, %v277
  %v927 = vpop.permute.xlu0 %926
  %v929 = vmul.f32 %v920, %v923
  %v930 = vmul.f32 %v920, %v927
  %s931 = scalar_lea.vmem [#allocation2], 176
  %v932 = vld [vmem:[%s931] sm:$0xff]
  %v933 = vld [vmem:[%s931 + $0x8] sm:$0xff]
  %v934 = vmul.f32 %v932, %v862
  %v935 = vmul.f32 %v933, %v863
  %v936 = vadd.f32 %v934, %v929
  %v937 = vadd.f32 %v935, %v930
  %938 = vset.pattern.permute.xlu0 11
  %939 = vperm.xlu0 %938, %v314
  %v940 = vpop.permute.xlu0 %939
  %942 = vset.pattern.permute.xlu0 11
  %943 = vperm.xlu0 %942, %v315
  %v944 = vpop.permute.xlu0 %943
  %v946 = vmul.f32 %v936, %v940
  %v947 = vmul.f32 %v937, %v944
  %v948 = vsel %vm186, %v946, 0.0
  %v949 = vsel %vm186, %v947, 0.0
  %v950 = vadd.f32 %v948, %v949
  %v951 = vrot.slane %v950, 4
  %v952 = vadd.f32 %v950, %v951
  %v953 = vrot.slane %v952, 2
  %v954 = vadd.f32 %v952, %v953
  %v955 = vrot.slane %v954, 1
  %v956 = vadd.f32 %v954, %v955
  %v957 = vperm.slane %v509, 4
  %958 = vset.pattern.permute.xlu0 12
  %959 = vperm.xlu0 %958, %v276
  %v960 = vpop.permute.xlu0 %959
  %962 = vset.pattern.permute.xlu0 12
  %963 = vperm.xlu0 %962, %v277
  %v964 = vpop.permute.xlu0 %963
  %v966 = vmul.f32 %v957, %v960
  %v967 = vmul.f32 %v957, %v964
  %s968 = scalar_lea.vmem [#allocation2], 192
  %v969 = vld [vmem:[%s968] sm:$0xff]
  %v970 = vld [vmem:[%s968 + $0x8] sm:$0xff]
  %v971 = vmul.f32 %v969, %v899
  %v972 = vmul.f32 %v970, %v900
  %v973 = vadd.f32 %v971, %v966
  %v974 = vadd.f32 %v972, %v967
  %975 = vset.pattern.permute.xlu0 12
  %976 = vperm.xlu0 %975, %v314
  %v977 = vpop.permute.xlu0 %976
  %979 = vset.pattern.permute.xlu0 12
  %980 = vperm.xlu0 %979, %v315
  %v981 = vpop.permute.xlu0 %980
  %v983 = vmul.f32 %v973, %v977
  %v984 = vmul.f32 %v974, %v981
  %v985 = vsel %vm186, %v983, 0.0
  %v986 = vsel %vm186, %v984, 0.0
  %v987 = vadd.f32 %v985, %v986
  %v988 = vrot.slane %v987, 4
  %v989 = vadd.f32 %v987, %v988
  %v990 = vrot.slane %v989, 2
  %v991 = vadd.f32 %v989, %v990
  %v992 = vrot.slane %v991, 1
  %v993 = vadd.f32 %v991, %v992
  %v994 = vperm.slane %v509, 5
  %995 = vset.pattern.permute.xlu0 13
  %996 = vperm.xlu0 %995, %v276
  %v997 = vpop.permute.xlu0 %996
  %999 = vset.pattern.permute.xlu0 13
  %1000 = vperm.xlu0 %999, %v277
  %v1001 = vpop.permute.xlu0 %1000
  %v1003 = vmul.f32 %v994, %v997
  %v1004 = vmul.f32 %v994, %v1001
  %s1005 = scalar_lea.vmem [#allocation2], 208
  %v1006 = vld [vmem:[%s1005] sm:$0xff]
  %v1007 = vld [vmem:[%s1005 + $0x8] sm:$0xff]
  %v1008 = vmul.f32 %v1006, %v936
  %v1009 = vmul.f32 %v1007, %v937
  %v1010 = vadd.f32 %v1008, %v1003
  %v1011 = vadd.f32 %v1009, %v1004
  %1012 = vset.pattern.permute.xlu0 13
  %1013 = vperm.xlu0 %1012, %v314
  %v1014 = vpop.permute.xlu0 %1013
  %1016 = vset.pattern.permute.xlu0 13
  %1017 = vperm.xlu0 %1016, %v315
  %v1018 = vpop.permute.xlu0 %1017
  %v1020 = vmul.f32 %v1010, %v1014
  %v1021 = vmul.f32 %v1011, %v1018
  %v1022 = vsel %vm186, %v1020, 0.0
  %v1023 = vsel %vm186, %v1021, 0.0
  %v1024 = vadd.f32 %v1022, %v1023
  %v1025 = vrot.slane %v1024, 4
  %v1026 = vadd.f32 %v1024, %v1025
  %v1027 = vrot.slane %v1026, 2
  %v1028 = vadd.f32 %v1026, %v1027
  %v1029 = vrot.slane %v1028, 1
  %v1030 = vadd.f32 %v1028, %v1029
  %v1031 = vperm.slane %v509, 6
  %1032 = vset.pattern.permute.xlu0 14
  %1033 = vperm.xlu0 %1032, %v276
  %v1034 = vpop.permute.xlu0 %1033
  %1036 = vset.pattern.permute.xlu0 14
  %1037 = vperm.xlu0 %1036, %v277
  %v1038 = vpop.permute.xlu0 %1037
  %v1040 = vmul.f32 %v1031, %v1034
  %v1041 = vmul.f32 %v1031, %v1038
  %s1042 = scalar_lea.vmem [#allocation2], 224
  %v1043 = vld [vmem:[%s1042] sm:$0xff]
  %v1044 = vld [vmem:[%s1042 + $0x8] sm:$0xff]
  %v1045 = vmul.f32 %v1043, %v973
  %v1046 = vmul.f32 %v1044, %v974
  %v1047 = vadd.f32 %v1045, %v1040
  %v1048 = vadd.f32 %v1046, %v1041
  %1049 = vset.pattern.permute.xlu0 14
  %1050 = vperm.xlu0 %1049, %v314
  %v1051 = vpop.permute.xlu0 %1050
  %1053 = vset.pattern.permute.xlu0 14
  %1054 = vperm.xlu0 %1053, %v315
  %v1055 = vpop.permute.xlu0 %1054
  %v1057 = vmul.f32 %v1047, %v1051
  %v1058 = vmul.f32 %v1048, %v1055
  %v1059 = vsel %vm186, %v1057, 0.0
  %v1060 = vsel %vm186, %v1058, 0.0
  %v1061 = vadd.f32 %v1059, %v1060
  %v1062 = vrot.slane %v1061, 4
  %v1063 = vadd.f32 %v1061, %v1062
  %v1064 = vrot.slane %v1063, 2
  %v1065 = vadd.f32 %v1063, %v1064
  %v1066 = vrot.slane %v1065, 1
  %v1067 = vadd.f32 %v1065, %v1066
  %v1068 = vperm.slane %v509, 7
  %1069 = vset.pattern.permute.xlu0 15
  %1070 = vperm.xlu0 %1069, %v276
  %v1071 = vpop.permute.xlu0 %1070
  %1073 = vset.pattern.permute.xlu0 15
  %1074 = vperm.xlu0 %1073, %v277
  %v1075 = vpop.permute.xlu0 %1074
  %v1077 = vmul.f32 %v1068, %v1071
  %v1078 = vmul.f32 %v1068, %v1075
  %s1079 = scalar_lea.vmem [#allocation2], 240
  %v1080 = vld [vmem:[%s1079] sm:$0xff]
  %v1081 = vld [vmem:[%s1079 + $0x8] sm:$0xff]
  %v1082 = vmul.f32 %v1080, %v1010
  %v1083 = vmul.f32 %v1081, %v1011
  %v1084 = vadd.f32 %v1082, %v1077
  %v1085 = vadd.f32 %v1083, %v1078
  %1086 = vset.pattern.permute.xlu0 15
  %1087 = vperm.xlu0 %1086, %v314
  %v1088 = vpop.permute.xlu0 %1087
  %1090 = vset.pattern.permute.xlu0 15
  %1091 = vperm.xlu0 %1090, %v315
  %v1092 = vpop.permute.xlu0 %1091
  %v1094 = vmul.f32 %v1084, %v1088
  %v1095 = vmul.f32 %v1085, %v1092
  %v1096 = vsel %vm186, %v1094, 0.0
  %v1097 = vsel %vm186, %v1095, 0.0
  %v1098 = vadd.f32 %v1096, %v1097
  %v1099 = vrot.slane %v1098, 4
  %v1100 = vadd.f32 %v1098, %v1099
  %v1101 = vrot.slane %v1100, 2
  %v1102 = vadd.f32 %v1100, %v1101
  %v1103 = vrot.slane %v1102, 1
  %v1104 = vadd.f32 %v1102, %v1103
  %vm1105 = vcmask 1040384
  %v1106 = vsel %vm1105, %v549, %v586
  %v1107 = vsel %vm161, %v1106, %v623
  %vm1108 = vcmask 1042432
  %v1109 = vsel %vm1108, %v1107, %v660
  %v1110 = vsel %vm147, %v1109, %v697
  %vm1111 = vcmask 1044480
  %v1112 = vsel %vm1111, %v1110, %v734
  %v1113 = vsel %vm133, %v1112, %v771
  %vm1114 = vcmask 1046528
  %v1115 = vsel %vm1114, %v1113, %v808
  %v1116 = vsel %vm1105, %v845, %v882
  %v1117 = vsel %vm161, %v1116, %v919
  %v1118 = vsel %vm1108, %v1117, %v956
  %v1119 = vsel %vm147, %v1118, %v993
  %v1120 = vsel %vm1111, %v1119, %v1030
  %v1121 = vsel %vm133, %v1120, %v1067
  %v1122 = vsel %vm1114, %v1121, %v1104
  %v1123 = vld [vmem:[%s8] sm:$0x1]
  %v1125 = vperm.slane %v1123, 0
  %v1127 = vmul.f32 %v176, %v1125
  %v1128 = vmul.f32 %v177, %v1125
  %v1129 = vadd.f32 %v1115, %v1127
  %v1130 = vadd.f32 %v1122, %v1128
  %v1131 = vmul.f32 %v113, 0.5
  %v1132 = vmul.f32 %v116, 0.5
  %v1133 = vtanh.pop %v1131
  %v1134 = vtanh.pop %v1132
  %v1135 = vadd.f32 %v1133, 1.0
  %v1136 = vadd.f32 %v1134, 1.0
  %v1137 = vmul.f32 %v1131, %v1135
  %v1138 = vmul.f32 %v1132, %v1136
  %1141 = vrot.lane.b32.xlu0 %v1137, 64
  %v1142 = vpop.permute.xlu0 %1141
  %1143 = vrot.lane.b32.xlu0 %v1138, 64
  %v1144 = vpop.permute.xlu0 %1143
  %v1147 = vmul.f32 %v1129, %v1142
  %v1148 = vmul.f32 %v1130, %v1144
  %v1149 = vld [vmem:[%s9] sm:$0xff]
  %v1150 = vld [vmem:[%s9 + $0x8] sm:$0xff]
  %v1151 = vld [vmem:[%s9 + $0x10] sm:$0xff]
  %v1152 = vld [vmem:[%s9 + $0x18] sm:$0xff]
  %v1153 = vld [vmem:[%s9 + $0x20] sm:$0xff]
  %v1154 = vld [vmem:[%s9 + $0x28] sm:$0xff]
  %v1155 = vld [vmem:[%s9 + $0x30] sm:$0xff]
  %v1156 = vld [vmem:[%s9 + $0x38] sm:$0xff]
  %v1158 = vsel %vm186, %v1147, 0
  %v1161 = vsel %vm186, %v1148, 0
  %1163 = vmatpush.msra.mxu0 0.0
  %1164 = vmatpush.msra.mxu0 0.0
  %1165 = vmatpush.msra.mxu0 0.0
  %1166 = vmatpush.msra.mxu0 0.0
  %1167 = vmatpush.msra.mxu0 0.0
  %1168 = vmatpush.msra.mxu0 0.0
  %1169 = vmatpush.msra.mxu0 0.0
  %1170 = vmatpush.msra.mxu0 0.0
  %1171 = vmatpush.msra.mxu0 %v1156
  %1172 = vmatpush.msra.mxu0 %v1155
  %1173 = vmatpush.msra.mxu0 %v1154
  %1174 = vmatpush.msra.mxu0 %v1153
  %1175 = vmatpush.msra.mxu0 %v1152
  %1176 = vmatpush.msra.mxu0 %v1151
  %1177 = vmatpush.msra.mxu0 %v1150
  %1178 = vmatpush.msra.mxu0 %v1149
  %1179 = vmatmul.f32.gmra.mxu0 %v1158
  %v1180 = vpop.f32.mrf.mxu0
  %v1181 = vadd.f32 %v35, %v1180
  %1182 = vmatmul.f32.gmra.mxu0 %v1161
  %v1183 = vpop.f32.mrf.mxu0
  %v1184 = vadd.f32 %v36, %v1183
  %1185 = vdwg.mxu0
  %1186 = vst.msk [vmem:[%s10] sm:$0xff] %vm39, %v1181
  %1187 = vst.msk [vmem:[%s10 + $0x8] sm:$0xff] %vm39, %v1184
  // Predicated region
  $region42: #{mamba_block.1} parent=0 // pred_check
    _
  $region43: #{mamba_block.1} parent=0 // pred_check_branch
    %1189 = sbr.rel (0) target = $region45
  $region44: #{mamba_block.1} parent=0 // pred_region
    _
  $region45: #{mamba_block.1} parent=0 // pred_fallthru
    _
  // Predicated region
  $region46: #{mamba_block.1} parent=0 // pred_check
    _
  $region47: #{mamba_block.1} parent=0 // pred_check_branch
    %1191 = sbr.rel (0) target = $region49
  $region48: #{mamba_block.1} parent=0 // pred_region
    _
  $region49: #{mamba_block.1} parent=0 // pred_fallthru
    _

</llo_original>
